<compile_context>
chip_gen: v6e
topology: v6e:2x2x1
jax: 0.10.0
libtpu: 0.0.40
codegen_flags: <defaults>
</compile_context>

<pallas_src>
import functools
import math

import jax
import jax.numpy as jnp
from jax import lax
from jax.experimental import pallas as pl
from jax.experimental.pallas import tpu as pltpu


def _tf_attention_kernel(x_ref, mask_ref, wqkv_ref, bqkv_ref, wo_ref,
                         bo_ref, gamma_ref, beta_ref, o_ref, acc_ref,
                         *, head_dim):
    """One (batch b, head h) grid step.

    x_ref:    (1, S, H)     activations for batch b (storage dtype)
    mask_ref: (1, 1, S)     additive attention mask for batch b (f32)
    wqkv_ref: (1, H, 3*hd)  head-h fused [Wq|Wk|Wv] columns (scale folded into Wq)
    bqkv_ref: (1, 1, 3*hd)  head-h fused bias (scale folded into bq)
    wo_ref:   (1, hd, H)    head-h rows of the output projection
    bo/gamma/beta: (1, H)
    o_ref:    (1, S, H)     written only at the last head step
    acc_ref:  (S, H) f32    VMEM scratch accumulating sum_h ctx_h @ Wo_h
    """
    h = pl.program_id(1)

    @pl.when(h == 0)
    def _():
        acc_ref[...] = jnp.zeros_like(acc_ref)

    x = x_ref[0]                                               # (S, H), storage dtype

    # Fused per-head QKV projection: one MXU matmul (N = 3*hd), f32 accumulation.
    qkv = jnp.dot(x, wqkv_ref[0], preferred_element_type=jnp.float32)
    qkv = qkv + bqkv_ref[0].astype(jnp.float32)                # (S, 3*hd)
    q = qkv[:, :head_dim]                                      # 1/sqrt(hd) pre-folded
    k = qkv[:, head_dim:2 * head_dim]
    v = qkv[:, 2 * head_dim:]

    # scores = Q K^T + mask   (f32; scale already folded into Q).
    scores = lax.dot_general(q.astype(x.dtype), k.astype(x.dtype),
                             (((1,), (1,)), ((), ())),
                             preferred_element_type=jnp.float32)   # (S, S)
    scores = scores + mask_ref[0].astype(jnp.float32)

    # Numerically-stable softmax with DEFERRED normalization: matmul the unnormalized
    # exp, then rescale the (S, hd) context by the row-sum reciprocal (EUP slot)
    # instead of dividing the (S, S) probabilities.
    m = jnp.max(scores, axis=-1, keepdims=True)
    e = jnp.exp(scores - m)                                    # (S, S) f32
    denom = jnp.sum(e, axis=-1, keepdims=True)                 # (S, 1)
    ctx = jnp.dot(e.astype(x.dtype), v.astype(x.dtype),
                  preferred_element_type=jnp.float32)          # (S, hd)
    inv = pl.reciprocal(denom, approx=True)                    # EUP
    inv = inv * (2.0 - denom * inv)                            # 1 Newton step -> ~f32 exact
    ctx = ctx * inv

    # Fold this head's slice of the output projection: acc += ctx_h @ Wo_h.
    acc_ref[...] += jnp.dot(ctx.astype(wo_ref.dtype), wo_ref[0],
                            preferred_element_type=jnp.float32)

    # TODO(synk): attention-probs / hidden dropout omitted -- identity in eval mode.
    @pl.when(h == pl.num_programs(1) - 1)
    def _():
        out = acc_ref[...] + bo_ref[...].astype(jnp.float32) + x.astype(jnp.float32)
        mu = jnp.mean(out, axis=-1, keepdims=True)
        var = jnp.mean(jnp.square(out - mu), axis=-1, keepdims=True)
        y = (out - mu) * lax.rsqrt(var + jnp.float32(1e-12))
        y = y * gamma_ref[...].astype(jnp.float32) + beta_ref[...].astype(jnp.float32)
        o_ref[0] = y.astype(o_ref.dtype)


def tf_attention(hidden_states, attention_mask, params, *, num_heads):
    """hidden_states: [B, S, H]; attention_mask: [B, 1, 1, S] (additive) -> [B, S, H]."""
    B, S, H = hidden_states.shape
    assert H % num_heads == 0
    head_dim = H // num_heads
    dtype = hidden_states.dtype
    scale = 1.0 / math.sqrt(head_dim)

    # Head-major fused QKV weights: (nh, H, 3*hd) with [q | k | v] columns per head.
    # The 1/sqrt(hd) softmax scale is folded into the Q columns / Q bias once here.
    def head_cols(w):    # (H, H) stored [in, out] -> (nh, H, hd)
        return w.reshape(H, num_heads, head_dim).transpose(1, 0, 2)

    def head_bias(b):    # (H,) -> (nh, 1, hd)
        return b.reshape(num_heads, 1, head_dim)

    w_qkv = jnp.concatenate([head_cols(params["wq"]) * scale,
                             head_cols(params["wk"]),
                             head_cols(params["wv"])], axis=-1).astype(dtype)
    b_qkv = jnp.concatenate([head_bias(params["bq"]) * scale,
                             head_bias(params["bk"]),
                             head_bias(params["bv"])], axis=-1).astype(dtype)
    wo = params["wo"].reshape(num_heads, head_dim, H).astype(dtype)   # per-head rows
    bo = params["bo"].reshape(1, H).astype(dtype)
    gamma = params["ln_gamma"].reshape(1, H).astype(dtype)
    beta = params["ln_beta"].reshape(1, H).astype(dtype)
    mask = attention_mask.reshape(B, 1, S).astype(jnp.float32)        # keep mask exact

    kernel = functools.partial(_tf_attention_kernel, head_dim=head_dim)

    # Advisory cost estimate (weights counted once).
    itemsize = jnp.dtype(dtype).itemsize
    flops = int(B * (8 * S * H * H + 4 * S * S * H))
    transcendentals = int(B * num_heads * S * S)
    bytes_accessed = int(2 * B * S * H * itemsize + B * S * 4
                         + (4 * H * H + 6 * H) * itemsize)

    # Scoped-VMEM budget: double-buffered activation / per-head weight blocks + the
    # f32 accumulator + in-flight (S,S) f32 softmax temporaries (+ slack).
    vmem_est = int(4 * S * H * itemsize                          # x + out, 2 bufs each
                   + 2 * S * 4                                   # mask
                   + 2 * (3 * H * head_dim + 3 * head_dim
                          + head_dim * H) * itemsize             # per-head weights, 2 bufs
                   + 3 * H * itemsize                            # bo / gamma / beta
                   + S * H * 4                                   # acc scratch
                   + 6 * S * S * 4                               # softmax temporaries
                   + (4 << 20))                                  # slack
    vmem_limit = min(max(vmem_est, 32 << 20), 64 << 20)

    def run(single_buffer_consts):
        if single_buffer_consts:
            def vec_spec():
                return pl.BlockSpec((1, H), lambda b, h: (0, 0),
                                    pipeline_mode=pl.Buffered(1))
        else:
            def vec_spec():
                return pl.BlockSpec((1, H), lambda b, h: (0, 0))

        grid_spec = pltpu.PrefetchScalarGridSpec(
            num_scalar_prefetch=0,
            grid=(B, num_heads),                       # head (reduction) axis innermost
            in_specs=[
                pl.BlockSpec((1, S, H), lambda b, h: (b, 0, 0)),             # x
                pl.BlockSpec((1, 1, S), lambda b, h: (b, 0, 0)),             # mask
                pl.BlockSpec((1, H, 3 * head_dim), lambda b, h: (h, 0, 0)),  # Wqkv_h
                pl.BlockSpec((1, 1, 3 * head_dim), lambda b, h: (h, 0, 0)),  # bqkv_h
                pl.BlockSpec((1, head_dim, H), lambda b, h: (h, 0, 0)),      # Wo_h
                vec_spec(),                                                   # bo
                vec_spec(),                                                   # LN gamma
                vec_spec(),                                                   # LN beta
            ],
            out_specs=pl.BlockSpec((1, S, H), lambda b, h: (b, 0, 0)),
            scratch_shapes=[pltpu.VMEM((S, H), jnp.float32)],
        )
        return pl.pallas_call(
            kernel,
            out_shape=jax.ShapeDtypeStruct((B, S, H), dtype),
            grid_spec=grid_spec,
            compiler_params=pltpu.CompilerParams(
                dimension_semantics=("parallel", "arbitrary"),
                vmem_limit_bytes=vmem_limit),
            cost_estimate=pl.CostEstimate(flops=flops,
                                          transcendentals=transcendentals,
                                          bytes_accessed=bytes_accessed),
        )(hidden_states, mask, w_qkv, b_qkv, wo, bo, gamma, beta)

    # TODO(synk): flash-style query tiling (extra "parallel" grid axis + online softmax)
    # for long sequences on v7x; whole-sequence (S,S) scores fit VMEM at these shapes.
    try:
        return run(single_buffer_consts=True)
    except Exception:
        # Fallback for JAX builds without BlockSpec(pipeline_mode=...) support.
        return run(single_buffer_consts=False)


def init_params(key, hidden_size, dtype=jnp.float32):
    """Deterministic synthetic params mirroring the module's Linear/LayerNorm."""
    ks = jax.random.split(key, 4)
    scale = 0.02
    def w(k):  # stored [in, out] so kernels do x @ W
        return (scale * jax.random.normal(k, (hidden_size, hidden_size))).astype(dtype)
    return {
        "wq": w(ks[0]), "bq": jnp.zeros((hidden_size,), dtype),
        "wk": w(ks[1]), "bk": jnp.zeros((hidden_size,), dtype),
        "wv": w(ks[2]), "bv": jnp.zeros((hidden_size,), dtype),
        "wo": w(ks[3]), "bo": jnp.zeros((hidden_size,), dtype),
        "ln_gamma": jnp.ones((hidden_size,), dtype),
        "ln_beta": jnp.zeros((hidden_size,), dtype),
    }


def _reference(x, attention_mask, params, num_heads):
    """Plain-JAX reference of TfAttention.forward (eval mode)."""
    B, S, H = x.shape
    hd = H // num_heads
    xf = x.astype(jnp.float32)
    q = xf @ params["wq"] + params["bq"]
    k = xf @ params["wk"] + params["bk"]
    v = xf @ params["wv"] + params["bv"]
    split = lambda t: t.reshape(B, S, num_heads, hd).transpose(0, 2, 1, 3)
    q, k, v = split(q), split(k), split(v)
    scores = jnp.einsum("bhqd,bhkd->bhqk", q, k) / math.sqrt(hd)
    scores = scores + attention_mask.astype(jnp.float32)        # (B,1,1,S) broadcast
    probs = jax.nn.softmax(scores, axis=-1)
    ctx = jnp.einsum("bhqk,bhkd->bhqd", probs, v)
    ctx = ctx.transpose(0, 2, 1, 3).reshape(B, S, H)
    out = ctx @ params["wo"] + params["bo"]
    h = out + xf
    mu = jnp.mean(h, axis=-1, keepdims=True)
    var = jnp.mean(jnp.square(h - mu), axis=-1, keepdims=True)
    h = (h - mu) * jax.lax.rsqrt(var + 1e-12)
    h = h * params["ln_gamma"] + params["ln_beta"]
    return h.astype(x.dtype)


if __name__ == "__main__":
    B, S, H, NH = 2, 8, 32, 4        # small shapes; head_dim = 8
    key = jax.random.PRNGKey(0)
    k_x, k_p = jax.random.split(key)

    hidden_states = jax.random.normal(k_x, (B, S, H), dtype=jnp.float32)
    # Standard BERT extended mask [B, 1, 1, S]: 0 = keep, -10000 = masked.
    mask = jnp.zeros((B, 1, 1, S), jnp.float32)
    mask = mask.at[1, :, :, S - 2:].set(-10000.0)     # pad last 2 positions of batch 1
    params = init_params(k_p, H)

    out = tf_attention(hidden_states, mask, params, num_heads=NH)
    out = jax.block_until_ready(out)

    ref = _reference(hidden_states, mask, params, NH)
    assert out.shape == (B, S, H)
    # Tolerance accounts for the (mathematically equivalent) reorderings: folded
    # softmax scale, fused QKV projection and deferred softmax normalization.
    max_err = jnp.max(jnp.abs(out - ref))
    assert jnp.allclose(out, ref, atol=1e-3, rtol=1e-3), \
        f"mismatch vs reference (max abs err {max_err})"

    print("KERNEL_OK")
</pallas_src>

<mosaic_0001>
module attributes {stable_mosaic.version = 11 : i64} {
  func.func @_tf_attention_kernel(%arg0: i32, %arg1: i32, %arg2: memref<1x8x32xf32, #tpu.memory_space<vmem>>, %arg3: memref<1x1x8xf32, #tpu.memory_space<vmem>>, %arg4: memref<1x32x24xf32, #tpu.memory_space<vmem>>, %arg5: memref<1x1x24xf32, #tpu.memory_space<vmem>>, %arg6: memref<1x8x32xf32, #tpu.memory_space<vmem>>, %arg7: memref<1x32xf32, #tpu.memory_space<vmem>>, %arg8: memref<1x32xf32, #tpu.memory_space<vmem>>, %arg9: memref<1x32xf32, #tpu.memory_space<vmem>>, %arg10: memref<1x8x32xf32, #tpu.memory_space<vmem>>, %arg11: memref<8x32xf32, #tpu.memory_space<vmem>>) attributes {dimension_semantics = [#tpu.dimension_semantics<parallel>, #tpu.dimension_semantics<arbitrary>], iteration_bounds = array<i64: 2, 4>, scalar_prefetch = 0 : i64, scratch_operands = 1 : i64, tpu.core_type = #tpu.core_type<tc>, window_params = [{transform_indices = @transform_0, window_bounds = array<i64: 1, 8, 32>}, {transform_indices = @transform_1, window_bounds = array<i64: 1, 1, 8>}, {transform_indices = @transform_2, window_bounds = array<i64: 1, 32, 24>}, {transform_indices = @transform_3, window_bounds = array<i64: 1, 1, 24>}, {transform_indices = @transform_4, window_bounds = array<i64: 1, 8, 32>}, {pipeline_mode = #tpu.pipeline_mode<synchronous>, transform_indices = @transform_5, window_bounds = array<i64: 1, 32>}, {pipeline_mode = #tpu.pipeline_mode<synchronous>, transform_indices = @transform_6, window_bounds = array<i64: 1, 32>}, {pipeline_mode = #tpu.pipeline_mode<synchronous>, transform_indices = @transform_7, window_bounds = array<i64: 1, 32>}, {transform_indices = @transform_8, window_bounds = array<i64: 1, 8, 32>}]} {
    %c0_i32 = arith.constant 0 : i32
    %0 = arith.cmpi eq, %arg1, %c0_i32 : i32
    %1 = arith.extui %0 : i1 to i32
    %c0_i32_0 = arith.constant 0 : i32
    %2 = arith.cmpi ne, %1, %c0_i32_0 : i32
    scf.if %2 {
      %cst_26 = arith.constant 0.000000e+00 : f32
      %44 = vector.broadcast %cst_26 : f32 to vector<8x32xf32>
      %c0_27 = arith.constant 0 : index
      %c0_28 = arith.constant 0 : index
      %45 = vector.load %arg11[%c0_27, %c0_28] : memref<8x32xf32, #tpu.memory_space<vmem>>, vector<8x32xf32>
      tpu.vector_store %arg11[%c0_27, %c0_28], %44 {strides = array<i32>} : memref<8x32xf32, #tpu.memory_space<vmem>>, vector<8x32xf32>,
    } else {
    }
    %c0 = arith.constant 0 : index
    %c0_1 = arith.constant 0 : index
    %c0_2 = arith.constant 0 : index
    %3 = vector.load %arg2[%c0, %c0_1, %c0_2] : memref<1x8x32xf32, #tpu.memory_space<vmem>>, vector<1x8x32xf32>
    %4 = vector.shape_cast %3 : vector<1x8x32xf32> to vector<8x32xf32>
    %c0_3 = arith.constant 0 : index
    %c0_4 = arith.constant 0 : index
    %c0_5 = arith.constant 0 : index
    %5 = vector.load %arg4[%c0_3, %c0_4, %c0_5] : memref<1x32x24xf32, #tpu.memory_space<vmem>>, vector<1x32x24xf32>
    %6 = vector.shape_cast %5 : vector<1x32x24xf32> to vector<32x24xf32>
    %cst = arith.constant dense<0.000000e+00> : vector<8x24xf32>
    %7 = tpu.matmul %4, %6, %cst {dimension_numbers = #tpu.dot_dimension_numbers<[1], [0], [0], [1], [0, 0, 1, 1], [], []>} : vector<8x32xf32>, vector<32x24xf32>, vector<8x24xf32> -> vector<8x24xf32>
    %c0_6 = arith.constant 0 : index
    %c0_7 = arith.constant 0 : index
    %c0_8 = arith.constant 0 : index
    %8 = vector.load %arg5[%c0_6, %c0_7, %c0_8] : memref<1x1x24xf32, #tpu.memory_space<vmem>>, vector<1x1x24xf32>
    %9 = vector.shape_cast %8 : vector<1x1x24xf32> to vector<1x24xf32>
    %10 = vector.broadcast %9 : vector<1x24xf32> to vector<8x24xf32>
    %11 = arith.addf %7, %10 : vector<8x24xf32>
    %12 = vector.extract_strided_slice %11 {offsets = [0, 0], sizes = [8, 8], strides = [1, 1]} : vector<8x24xf32> to vector<8x8xf32>
    %13 = vector.extract_strided_slice %11 {offsets = [0, 8], sizes = [8, 8], strides = [1, 1]} : vector<8x24xf32> to vector<8x8xf32>
    %14 = vector.extract_strided_slice %11 {offsets = [0, 16], sizes = [8, 8], strides = [1, 1]} : vector<8x24xf32> to vector<8x8xf32>
    %cst_9 = arith.constant dense<0.000000e+00> : vector<8x8xf32>
    %15 = tpu.matmul %12, %13, %cst_9 {dimension_numbers = #tpu.dot_dimension_numbers<[1], [1], [0], [0], [0, 0, 1, 0], [], []>} : vector<8x8xf32>, vector<8x8xf32>, vector<8x8xf32> -> vector<8x8xf32>
    %c0_10 = arith.constant 0 : index
    %c0_11 = arith.constant 0 : index
    %c0_12 = arith.constant 0 : index
    %16 = vector.load %arg3[%c0_10, %c0_11, %c0_12] : memref<1x1x8xf32, #tpu.memory_space<vmem>>, vector<1x1x8xf32>
    %17 = vector.shape_cast %16 : vector<1x1x8xf32> to vector<1x8xf32>
    %18 = vector.broadcast %17 : vector<1x8xf32> to vector<8x8xf32>
    %19 = arith.addf %15, %18 : vector<8x8xf32>
    %cst_13 = arith.constant dense<0xFF800000> : vector<8xf32>
    %20 = vector.multi_reduction <maximumf>, %19, %cst_13 [1] : vector<8x8xf32> to vector<8xf32>
    %21 = vector.shape_cast %20 : vector<8xf32> to vector<8x1xf32>
    %22 = vector.broadcast %21 : vector<8x1xf32> to vector<8x8xf32>
    %23 = arith.subf %19, %22 : vector<8x8xf32>
    %24 = math.exp %23 : vector<8x8xf32>
    %cst_14 = arith.constant dense<0.000000e+00> : vector<8xf32>
    %25 = vector.multi_reduction <add>, %24, %cst_14 [1] : vector<8x8xf32> to vector<8xf32>
    %26 = vector.shape_cast %25 : vector<8xf32> to vector<8x1xf32>
    %cst_15 = arith.constant dense<0.000000e+00> : vector<8x8xf32>
    %27 = tpu.matmul %24, %14, %cst_15 {dimension_numbers = #tpu.dot_dimension_numbers<[1], [0], [0], [1], [0, 0, 1, 1], [], []>} : vector<8x8xf32>, vector<8x8xf32>, vector<8x8xf32> -> vector<8x8xf32>
    %28 = tpu.reciprocal %26 {approx = true} : vector<8x1xf32> -> vector<8x1xf32>
    %29 = arith.mulf %26, %28 : vector<8x1xf32>
    %cst_16 = arith.constant 2.000000e+00 : f32
    %30 = vector.broadcast %cst_16 : f32 to vector<8x1xf32>
    %31 = arith.subf %30, %29 : vector<8x1xf32>
    %32 = arith.mulf %28, %31 : vector<8x1xf32>
    %33 = vector.broadcast %32 : vector<8x1xf32> to vector<8x8xf32>
    %34 = arith.mulf %27, %33 : vector<8x8xf32>
    %c0_17 = arith.constant 0 : index
    %c0_18 = arith.constant 0 : index
    %35 = vector.load %arg11[%c0_17, %c0_18] : memref<8x32xf32, #tpu.memory_space<vmem>>, vector<8x32xf32>
    %c0_19 = arith.constant 0 : index
    %c0_20 = arith.constant 0 : index
    %c0_21 = arith.constant 0 : index
    %36 = vector.load %arg6[%c0_19, %c0_20, %c0_21] : memref<1x8x32xf32, #tpu.memory_space<vmem>>, vector<1x8x32xf32>
    %37 = vector.shape_cast %36 : vector<1x8x32xf32> to vector<8x32xf32>
    %cst_22 = arith.constant dense<0.000000e+00> : vector<8x32xf32>
    %38 = tpu.matmul %34, %37, %cst_22 {dimension_numbers = #tpu.dot_dimension_numbers<[1], [0], [0], [1], [0, 0, 1, 1], [], []>} : vector<8x8xf32>, vector<8x32xf32>, vector<8x32xf32> -> vector<8x32xf32>
    %39 = arith.addf %35, %38 : vector<8x32xf32>
    %c0_23 = arith.constant 0 : index
    %c0_24 = arith.constant 0 : index
    %40 = vector.load %arg11[%c0_23, %c0_24] : memref<8x32xf32, #tpu.memory_space<vmem>>, vector<8x32xf32>
    tpu.vector_store %arg11[%c0_23, %c0_24], %39 {strides = array<i32>} : memref<8x32xf32, #tpu.memory_space<vmem>>, vector<8x32xf32>,
    %c3_i32 = arith.constant 3 : i32
    %41 = arith.cmpi eq, %arg1, %c3_i32 : i32
    %42 = arith.extui %41 : i1 to i32
    %c0_i32_25 = arith.constant 0 : i32
    %43 = arith.cmpi ne, %42, %c0_i32_25 : i32
    scf.if %43 {
      %c0_26 = arith.constant 0 : index
      %c0_27 = arith.constant 0 : index
      %44 = vector.load %arg11[%c0_26, %c0_27] : memref<8x32xf32, #tpu.memory_space<vmem>>, vector<8x32xf32>
      %c0_28 = arith.constant 0 : index
      %c0_29 = arith.constant 0 : index
      %45 = vector.load %arg7[%c0_28, %c0_29] : memref<1x32xf32, #tpu.memory_space<vmem>>, vector<1x32xf32>
      %46 = vector.broadcast %45 : vector<1x32xf32> to vector<8x32xf32>
      %47 = arith.addf %44, %46 : vector<8x32xf32>
      %48 = arith.addf %47, %4 : vector<8x32xf32>
      %cst_30 = arith.constant dense<0.000000e+00> : vector<8xf32>
      %49 = vector.multi_reduction <add>, %48, %cst_30 [1] : vector<8x32xf32> to vector<8xf32>
      %50 = vector.shape_cast %49 : vector<8xf32> to vector<8x1xf32>
      %cst_31 = arith.constant 3.200000e+01 : f32
      %51 = vector.broadcast %cst_31 : f32 to vector<8x1xf32>
      %52 = arith.divf %50, %51 : vector<8x1xf32>
      %53 = vector.broadcast %52 : vector<8x1xf32> to vector<8x32xf32>
      %54 = arith.subf %48, %53 : vector<8x32xf32>
      %55 = arith.mulf %54, %54 : vector<8x32xf32>
      %cst_32 = arith.constant dense<0.000000e+00> : vector<8xf32>
      %56 = vector.multi_reduction <add>, %55, %cst_32 [1] : vector<8x32xf32> to vector<8xf32>
      %57 = vector.shape_cast %56 : vector<8xf32> to vector<8x1xf32>
      %cst_33 = arith.constant 3.200000e+01 : f32
      %58 = vector.broadcast %cst_33 : f32 to vector<8x1xf32>
      %59 = arith.divf %57, %58 : vector<8x1xf32>
      %60 = vector.broadcast %52 : vector<8x1xf32> to vector<8x32xf32>
      %61 = arith.subf %48, %60 : vector<8x32xf32>
      %cst_34 = arith.constant 9.99999996E-13 : f32
      %62 = vector.broadcast %cst_34 : f32 to vector<8x1xf32>
      %63 = arith.addf %59, %62 : vector<8x1xf32>
      %64 = math.rsqrt %63 : vector<8x1xf32>
      %65 = vector.broadcast %64 : vector<8x1xf32> to vector<8x32xf32>
      %66 = arith.mulf %61, %65 : vector<8x32xf32>
      %c0_35 = arith.constant 0 : index
      %c0_36 = arith.constant 0 : index
      %67 = vector.load %arg8[%c0_35, %c0_36] : memref<1x32xf32, #tpu.memory_space<vmem>>, vector<1x32xf32>
      %68 = vector.broadcast %67 : vector<1x32xf32> to vector<8x32xf32>
      %69 = arith.mulf %66, %68 : vector<8x32xf32>
      %c0_37 = arith.constant 0 : index
      %c0_38 = arith.constant 0 : index
      %70 = vector.load %arg9[%c0_37, %c0_38] : memref<1x32xf32, #tpu.memory_space<vmem>>, vector<1x32xf32>
      %71 = vector.broadcast %70 : vector<1x32xf32> to vector<8x32xf32>
      %72 = arith.addf %69, %71 : vector<8x32xf32>
      %c0_39 = arith.constant 0 : index
      %c0_40 = arith.constant 0 : index
      %c0_41 = arith.constant 0 : index
      %73 = vector.load %arg10[%c0_39, %c0_40, %c0_41] : memref<1x8x32xf32, #tpu.memory_space<vmem>>, vector<1x8x32xf32>
      %74 = vector.shape_cast %73 : vector<1x8x32xf32> to vector<8x32xf32>
      %75 = vector.shape_cast %72 : vector<8x32xf32> to vector<1x8x32xf32>
      tpu.vector_store %arg10[%c0_39, %c0_40, %c0_41], %75 {strides = array<i32>} : memref<1x8x32xf32, #tpu.memory_space<vmem>>, vector<1x8x32xf32>,
    } else {
    }
    return
  }
  func.func @transform_0(%arg0: i32, %arg1: i32) -> (i32, i32, i32) {
    %c0_i32 = arith.constant 0 : i32
    %c0_i32_0 = arith.constant 0 : i32
    %c0_i32_1 = arith.constant 0 : i32
    return %arg0, %c0_i32, %c0_i32_0 : i32, i32, i32
  }
  func.func @transform_1(%arg0: i32, %arg1: i32) -> (i32, i32, i32) {
    %c0_i32 = arith.constant 0 : i32
    %c0_i32_0 = arith.constant 0 : i32
    %c0_i32_1 = arith.constant 0 : i32
    return %arg0, %c0_i32, %c0_i32_0 : i32, i32, i32
  }
  func.func @transform_2(%arg0: i32, %arg1: i32) -> (i32, i32, i32) {
    %c0_i32 = arith.constant 0 : i32
    %c0_i32_0 = arith.constant 0 : i32
    %c0_i32_1 = arith.constant 0 : i32
    return %arg1, %c0_i32, %c0_i32_0 : i32, i32, i32
  }
  func.func @transform_3(%arg0: i32, %arg1: i32) -> (i32, i32, i32) {
    %c0_i32 = arith.constant 0 : i32
    %c0_i32_0 = arith.constant 0 : i32
    %c0_i32_1 = arith.constant 0 : i32
    return %arg1, %c0_i32, %c0_i32_0 : i32, i32, i32
  }
  func.func @transform_4(%arg0: i32, %arg1: i32) -> (i32, i32, i32) {
    %c0_i32 = arith.constant 0 : i32
    %c0_i32_0 = arith.constant 0 : i32
    %c0_i32_1 = arith.constant 0 : i32
    return %arg1, %c0_i32, %c0_i32_0 : i32, i32, i32
  }
  func.func @transform_5(%arg0: i32, %arg1: i32) -> (i32, i32) {
    %c0_i32 = arith.constant 0 : i32
    %c0_i32_0 = arith.constant 0 : i32
    %c0_i32_1 = arith.constant 0 : i32
    return %c0_i32, %c0_i32_0 : i32, i32
  }
  func.func @transform_6(%arg0: i32, %arg1: i32) -> (i32, i32) {
    %c0_i32 = arith.constant 0 : i32
    %c0_i32_0 = arith.constant 0 : i32
    %c0_i32_1 = arith.constant 0 : i32
    return %c0_i32, %c0_i32_0 : i32, i32
  }
  func.func @transform_7(%arg0: i32, %arg1: i32) -> (i32, i32) {
    %c0_i32 = arith.constant 0 : i32
    %c0_i32_0 = arith.constant 0 : i32
    %c0_i32_1 = arith.constant 0 : i32
    return %c0_i32, %c0_i32_0 : i32, i32
  }
  func.func @transform_8(%arg0: i32, %arg1: i32) -> (i32, i32, i32) {
    %c0_i32 = arith.constant 0 : i32
    %c0_i32_0 = arith.constant 0 : i32
    %c0_i32_1 = arith.constant 0 : i32
    return %arg0, %c0_i32, %c0_i32_0 : i32, i32, i32
  }
}

module attributes {stable_mosaic.version = 11 : i64} {
  func.func @_tf_attention_kernel(%arg0: i32, %arg1: i32, %arg2: memref<1x8x32xf32, #tpu.memory_space<vmem>>, %arg3: memref<1x1x8xf32, #tpu.memory_space<vmem>>, %arg4: memref<1x32x24xf32, #tpu.memory_space<vmem>>, %arg5: memref<1x1x24xf32, #tpu.memory_space<vmem>>, %arg6: memref<1x8x32xf32, #tpu.memory_space<vmem>>, %arg7: memref<1x32xf32, #tpu.memory_space<vmem>>, %arg8: memref<1x32xf32, #tpu.memory_space<vmem>>, %arg9: memref<1x32xf32, #tpu.memory_space<vmem>>, %arg10: memref<1x8x32xf32, #tpu.memory_space<vmem>>, %arg11: memref<8x32xf32, #tpu.memory_space<vmem>>) attributes {dimension_semantics = [#tpu.dimension_semantics<parallel>, #tpu.dimension_semantics<arbitrary>], iteration_bounds = array<i64: 2, 4>, scalar_prefetch = 0 : i64, scratch_operands = 1 : i64, tpu.core_type = #tpu.core_type<tc>, window_params = [{transform_indices = @transform_0, window_bounds = array<i64: 1, 8, 32>}, {transform_indices = @transform_1, window_bounds = array<i64: 1, 1, 8>}, {transform_indices = @transform_2, window_bounds = array<i64: 1, 32, 24>}, {transform_indices = @transform_3, window_bounds = array<i64: 1, 1, 24>}, {transform_indices = @transform_4, window_bounds = array<i64: 1, 8, 32>}, {pipeline_mode = #tpu.pipeline_mode<synchronous>, transform_indices = @transform_5, window_bounds = array<i64: 1, 32>}, {pipeline_mode = #tpu.pipeline_mode<synchronous>, transform_indices = @transform_6, window_bounds = array<i64: 1, 32>}, {pipeline_mode = #tpu.pipeline_mode<synchronous>, transform_indices = @transform_7, window_bounds = array<i64: 1, 32>}, {transform_indices = @transform_8, window_bounds = array<i64: 1, 8, 32>}]} {
    %c0_i32 = arith.constant 0 : i32
    %0 = arith.cmpi eq, %arg1, %c0_i32 : i32
    %1 = arith.extui %0 : i1 to i32
    %c0_i32_0 = arith.constant 0 : i32
    %2 = arith.cmpi ne, %1, %c0_i32_0 : i32
    scf.if %2 {
      %cst_26 = arith.constant 0.000000e+00 : f32
      %44 = vector.broadcast %cst_26 : f32 to vector<8x32xf32>
      %c0_27 = arith.constant 0 : index
      %c0_28 = arith.constant 0 : index
      %45 = vector.load %arg11[%c0_27, %c0_28] : memref<8x32xf32, #tpu.memory_space<vmem>>, vector<8x32xf32>
      tpu.vector_store %arg11[%c0_27, %c0_28], %44 {strides = array<i32>} : memref<8x32xf32, #tpu.memory_space<vmem>>, vector<8x32xf32>,
    } else {
    }
    %c0 = arith.constant 0 : index
    %c0_1 = arith.constant 0 : index
    %c0_2 = arith.constant 0 : index
    %3 = vector.load %arg2[%c0, %c0_1, %c0_2] : memref<1x8x32xf32, #tpu.memory_space<vmem>>, vector<1x8x32xf32>
    %4 = vector.shape_cast %3 : vector<1x8x32xf32> to vector<8x32xf32>
    %c0_3 = arith.constant 0 : index
    %c0_4 = arith.constant 0 : index
    %c0_5 = arith.constant 0 : index
    %5 = vector.load %arg4[%c0_3, %c0_4, %c0_5] : memref<1x32x24xf32, #tpu.memory_space<vmem>>, vector<1x32x24xf32>
    %6 = vector.shape_cast %5 : vector<1x32x24xf32> to vector<32x24xf32>
    %cst = arith.constant dense<0.000000e+00> : vector<8x24xf32>
    %7 = tpu.matmul %4, %6, %cst {dimension_numbers = #tpu.dot_dimension_numbers<[1], [0], [0], [1], [0, 0, 1, 1], [], []>} : vector<8x32xf32>, vector<32x24xf32>, vector<8x24xf32> -> vector<8x24xf32>
    %c0_6 = arith.constant 0 : index
    %c0_7 = arith.constant 0 : index
    %c0_8 = arith.constant 0 : index
    %8 = vector.load %arg5[%c0_6, %c0_7, %c0_8] : memref<1x1x24xf32, #tpu.memory_space<vmem>>, vector<1x1x24xf32>
    %9 = vector.shape_cast %8 : vector<1x1x24xf32> to vector<1x24xf32>
    %10 = vector.broadcast %9 : vector<1x24xf32> to vector<8x24xf32>
    %11 = arith.addf %7, %10 : vector<8x24xf32>
    %12 = vector.extract_strided_slice %11 {offsets = [0, 0], sizes = [8, 8], strides = [1, 1]} : vector<8x24xf32> to vector<8x8xf32>
    %13 = vector.extract_strided_slice %11 {offsets = [0, 8], sizes = [8, 8], strides = [1, 1]} : vector<8x24xf32> to vector<8x8xf32>
    %14 = vector.extract_strided_slice %11 {offsets = [0, 16], sizes = [8, 8], strides = [1, 1]} : vector<8x24xf32> to vector<8x8xf32>
    %cst_9 = arith.constant dense<0.000000e+00> : vector<8x8xf32>
    %15 = tpu.matmul %12, %13, %cst_9 {dimension_numbers = #tpu.dot_dimension_numbers<[1], [1], [0], [0], [0, 0, 1, 0], [], []>} : vector<8x8xf32>, vector<8x8xf32>, vector<8x8xf32> -> vector<8x8xf32>
    %c0_10 = arith.constant 0 : index
    %c0_11 = arith.constant 0 : index
    %c0_12 = arith.constant 0 : index
    %16 = vector.load %arg3[%c0_10, %c0_11, %c0_12] : memref<1x1x8xf32, #tpu.memory_space<vmem>>, vector<1x1x8xf32>
    %17 = vector.shape_cast %16 : vector<1x1x8xf32> to vector<1x8xf32>
    %18 = vector.broadcast %17 : vector<1x8xf32> to vector<8x8xf32>
    %19 = arith.addf %15, %18 : vector<8x8xf32>
    %cst_13 = arith.constant dense<0xFF800000> : vector<8xf32>
    %20 = vector.multi_reduction <maximumf>, %19, %cst_13 [1] : vector<8x8xf32> to vector<8xf32>
    %21 = vector.shape_cast %20 : vector<8xf32> to vector<8x1xf32>
    %22 = vector.broadcast %21 : vector<8x1xf32> to vector<8x8xf32>
    %23 = arith.subf %19, %22 : vector<8x8xf32>
    %24 = math.exp %23 : vector<8x8xf32>
    %cst_14 = arith.constant dense<0.000000e+00> : vector<8xf32>
    %25 = vector.multi_reduction <add>, %24, %cst_14 [1] : vector<8x8xf32> to vector<8xf32>
    %26 = vector.shape_cast %25 : vector<8xf32> to vector<8x1xf32>
    %cst_15 = arith.constant dense<0.000000e+00> : vector<8x8xf32>
    %27 = tpu.matmul %24, %14, %cst_15 {dimension_numbers = #tpu.dot_dimension_numbers<[1], [0], [0], [1], [0, 0, 1, 1], [], []>} : vector<8x8xf32>, vector<8x8xf32>, vector<8x8xf32> -> vector<8x8xf32>
    %28 = tpu.reciprocal %26 {approx = true} : vector<8x1xf32> -> vector<8x1xf32>
    %29 = arith.mulf %26, %28 : vector<8x1xf32>
    %cst_16 = arith.constant 2.000000e+00 : f32
    %30 = vector.broadcast %cst_16 : f32 to vector<8x1xf32>
    %31 = arith.subf %30, %29 : vector<8x1xf32>
    %32 = arith.mulf %28, %31 : vector<8x1xf32>
    %33 = vector.broadcast %32 : vector<8x1xf32> to vector<8x8xf32>
    %34 = arith.mulf %27, %33 : vector<8x8xf32>
    %c0_17 = arith.constant 0 : index
    %c0_18 = arith.constant 0 : index
    %35 = vector.load %arg11[%c0_17, %c0_18] : memref<8x32xf32, #tpu.memory_space<vmem>>, vector<8x32xf32>
    %c0_19 = arith.constant 0 : index
    %c0_20 = arith.constant 0 : index
    %c0_21 = arith.constant 0 : index
    %36 = vector.load %arg6[%c0_19, %c0_20, %c0_21] : memref<1x8x32xf32, #tpu.memory_space<vmem>>, vector<1x8x32xf32>
    %37 = vector.shape_cast %36 : vector<1x8x32xf32> to vector<8x32xf32>
    %cst_22 = arith.constant dense<0.000000e+00> : vector<8x32xf32>
    %38 = tpu.matmul %34, %37, %cst_22 {dimension_numbers = #tpu.dot_dimension_numbers<[1], [0], [0], [1], [0, 0, 1, 1], [], []>} : vector<8x8xf32>, vector<8x32xf32>, vector<8x32xf32> -> vector<8x32xf32>
    %39 = arith.addf %35, %38 : vector<8x32xf32>
    %c0_23 = arith.constant 0 : index
    %c0_24 = arith.constant 0 : index
    %40 = vector.load %arg11[%c0_23, %c0_24] : memref<8x32xf32, #tpu.memory_space<vmem>>, vector<8x32xf32>
    tpu.vector_store %arg11[%c0_23, %c0_24], %39 {strides = array<i32>} : memref<8x32xf32, #tpu.memory_space<vmem>>, vector<8x32xf32>,
    %c3_i32 = arith.constant 3 : i32
    %41 = arith.cmpi eq, %arg1, %c3_i32 : i32
    %42 = arith.extui %41 : i1 to i32
    %c0_i32_25 = arith.constant 0 : i32
    %43 = arith.cmpi ne, %42, %c0_i32_25 : i32
    scf.if %43 {
      %c0_26 = arith.constant 0 : index
      %c0_27 = arith.constant 0 : index
      %44 = vector.load %arg11[%c0_26, %c0_27] : memref<8x32xf32, #tpu.memory_space<vmem>>, vector<8x32xf32>
      %c0_28 = arith.constant 0 : index
      %c0_29 = arith.constant 0 : index
      %45 = vector.load %arg7[%c0_28, %c0_29] : memref<1x32xf32, #tpu.memory_space<vmem>>, vector<1x32xf32>
      %46 = vector.broadcast %45 : vector<1x32xf32> to vector<8x32xf32>
      %47 = arith.addf %44, %46 : vector<8x32xf32>
      %48 = arith.addf %47, %4 : vector<8x32xf32>
      %cst_30 = arith.constant dense<0.000000e+00> : vector<8xf32>
      %49 = vector.multi_reduction <add>, %48, %cst_30 [1] : vector<8x32xf32> to vector<8xf32>
      %50 = vector.shape_cast %49 : vector<8xf32> to vector<8x1xf32>
      %cst_31 = arith.constant 3.200000e+01 : f32
      %51 = vector.broadcast %cst_31 : f32 to vector<8x1xf32>
      %52 = arith.divf %50, %51 : vector<8x1xf32>
      %53 = vector.broadcast %52 : vector<8x1xf32> to vector<8x32xf32>
      %54 = arith.subf %48, %53 : vector<8x32xf32>
      %55 = arith.mulf %54, %54 : vector<8x32xf32>
      %cst_32 = arith.constant dense<0.000000e+00> : vector<8xf32>
      %56 = vector.multi_reduction <add>, %55, %cst_32 [1] : vector<8x32xf32> to vector<8xf32>
      %57 = vector.shape_cast %56 : vector<8xf32> to vector<8x1xf32>
      %cst_33 = arith.constant 3.200000e+01 : f32
      %58 = vector.broadcast %cst_33 : f32 to vector<8x1xf32>
      %59 = arith.divf %57, %58 : vector<8x1xf32>
      %60 = vector.broadcast %52 : vector<8x1xf32> to vector<8x32xf32>
      %61 = arith.subf %48, %60 : vector<8x32xf32>
      %cst_34 = arith.constant 9.99999996E-13 : f32
      %62 = vector.broadcast %cst_34 : f32 to vector<8x1xf32>
      %63 = arith.addf %59, %62 : vector<8x1xf32>
      %64 = math.rsqrt %63 : vector<8x1xf32>
      %65 = vector.broadcast %64 : vector<8x1xf32> to vector<8x32xf32>
      %66 = arith.mulf %61, %65 : vector<8x32xf32>
      %c0_35 = arith.constant 0 : index
      %c0_36 = arith.constant 0 : index
      %67 = vector.load %arg8[%c0_35, %c0_36] : memref<1x32xf32, #tpu.memory_space<vmem>>, vector<1x32xf32>
      %68 = vector.broadcast %67 : vector<1x32xf32> to vector<8x32xf32>
      %69 = arith.mulf %66, %68 : vector<8x32xf32>
      %c0_37 = arith.constant 0 : index
      %c0_38 = arith.constant 0 : index
      %70 = vector.load %arg9[%c0_37, %c0_38] : memref<1x32xf32, #tpu.memory_space<vmem>>, vector<1x32xf32>
      %71 = vector.broadcast %70 : vector<1x32xf32> to vector<8x32xf32>
      %72 = arith.addf %69, %71 : vector<8x32xf32>
      %c0_39 = arith.constant 0 : index
      %c0_40 = arith.constant 0 : index
      %c0_41 = arith.constant 0 : index
      %73 = vector.load %arg10[%c0_39, %c0_40, %c0_41] : memref<1x8x32xf32, #tpu.memory_space<vmem>>, vector<1x8x32xf32>
      %74 = vector.shape_cast %73 : vector<1x8x32xf32> to vector<8x32xf32>
      %75 = vector.shape_cast %72 : vector<8x32xf32> to vector<1x8x32xf32>
      tpu.vector_store %arg10[%c0_39, %c0_40, %c0_41], %75 {strides = array<i32>} : memref<1x8x32xf32, #tpu.memory_space<vmem>>, vector<1x8x32xf32>,
    } else {
    }
    return
  }
  func.func @transform_0(%arg0: i32, %arg1: i32) -> (i32, i32, i32) {
    %c0_i32 = arith.constant 0 : i32
    %c0_i32_0 = arith.constant 0 : i32
    %c0_i32_1 = arith.constant 0 : i32
    return %arg0, %c0_i32, %c0_i32_0 : i32, i32, i32
  }
  func.func @transform_1(%arg0: i32, %arg1: i32) -> (i32, i32, i32) {
    %c0_i32 = arith.constant 0 : i32
    %c0_i32_0 = arith.constant 0 : i32
    %c0_i32_1 = arith.constant 0 : i32
    return %arg0, %c0_i32, %c0_i32_0 : i32, i32, i32
  }
  func.func @transform_2(%arg0: i32, %arg1: i32) -> (i32, i32, i32) {
    %c0_i32 = arith.constant 0 : i32
    %c0_i32_0 = arith.constant 0 : i32
    %c0_i32_1 = arith.constant 0 : i32
    return %arg1, %c0_i32, %c0_i32_0 : i32, i32, i32
  }
  func.func @transform_3(%arg0: i32, %arg1: i32) -> (i32, i32, i32) {
    %c0_i32 = arith.constant 0 : i32
    %c0_i32_0 = arith.constant 0 : i32
    %c0_i32_1 = arith.constant 0 : i32
    return %arg1, %c0_i32, %c0_i32_0 : i32, i32, i32
  }
  func.func @transform_4(%arg0: i32, %arg1: i32) -> (i32, i32, i32) {
    %c0_i32 = arith.constant 0 : i32
    %c0_i32_0 = arith.constant 0 : i32
    %c0_i32_1 = arith.constant 0 : i32
    return %arg1, %c0_i32, %c0_i32_0 : i32, i32, i32
  }
  func.func @transform_5(%arg0: i32, %arg1: i32) -> (i32, i32) {
    %c0_i32 = arith.constant 0 : i32
    %c0_i32_0 = arith.constant 0 : i32
    %c0_i32_1 = arith.constant 0 : i32
    return %c0_i32, %c0_i32_0 : i32, i32
  }
  func.func @transform_6(%arg0: i32, %arg1: i32) -> (i32, i32) {
    %c0_i32 = arith.constant 0 : i32
    %c0_i32_0 = arith.constant 0 : i32
    %c0_i32_1 = arith.constant 0 : i32
    return %c0_i32, %c0_i32_0 : i32, i32
  }
  func.func @transform_7(%arg0: i32, %arg1: i32) -> (i32, i32) {
    %c0_i32 = arith.constant 0 : i32
    %c0_i32_0 = arith.constant 0 : i32
    %c0_i32_1 = arith.constant 0 : i32
    return %c0_i32, %c0_i32_0 : i32, i32
  }
  func.func @transform_8(%arg0: i32, %arg1: i32) -> (i32, i32, i32) {
    %c0_i32 = arith.constant 0 : i32
    %c0_i32_0 = arith.constant 0 : i32
    %c0_i32_1 = arith.constant 0 : i32
    return %arg0, %c0_i32, %c0_i32_0 : i32, i32, i32
  }
}

</mosaic_0001>

<llo_original>
// kernel: tpu_custom_call.1
$region0: #{tpu_custom_call.1}
  #allocation0 [shape = 'u32[]', space=smem, size = 0x4, offset = 0x4, fixed_abs, tag = 'smem constant byte address 0x4 - core index']
  #allocation1 [shape = 'u32[144,128]{1,0:T(1,128)}', space=vmem, size = 0x12000, scoped, tag = 'internal scratch']
  #allocation2 [shape = 'f32[8,32]{1,0:T(8,128)}', space=vmem, size = 0x1000, scoped, tag = 'scratch operand']
  %s0 = inlined_call_operand.vmem [shape: f32[2,8,32], index: 0, kind: input, shape index: {}]
  %s1 = inlined_call_operand.vmem [shape: f32[2,1,8], index: 1, kind: input, shape index: {}]
  %s2 = inlined_call_operand.vmem [shape: f32[4,32,24], index: 2, kind: input, shape index: {}]
  %s3 = inlined_call_operand.vmem [shape: f32[4,1,24], index: 3, kind: input, shape index: {}]
  %s4 = inlined_call_operand.vmem [shape: f32[4,8,32], index: 4, kind: input, shape index: {}]
  %s5 = inlined_call_operand.vmem [shape: f32[1,32], index: 5, kind: input, shape index: {}]
  %s6 = inlined_call_operand.vmem [shape: f32[1,32], index: 6, kind: input, shape index: {}]
  %s7 = inlined_call_operand.vmem [shape: f32[1,32], index: 7, kind: input, shape index: {}]
  %s8 = inlined_call_operand.hbm [shape: f32[2,8,32], index: 8, kind: output, shape index: {}]
  %s9 = sld [smem:[#allocation0]]
  $region73: #{tpu_custom_call.1} parent=0
    _
  %s11 = ssub.s32 1, %s9
  %s12 = scalar_select 0, %s11, %s9
  $region1: #{tpu_custom_call.1} parent=0
    #allocation3 [shape = 'u8[8192]{0}', space=vmem, size = 0x2000, scoped, tag = 'output window, operand 0']
    #allocation4 [shape = 's32[2]{0}', space=sflag, size = 0x8, scoped, tag = 'scoped memory for tpu_custom_call.1']
    %13 = vsyncpa [#allocation4], 0
    %s14 = scalar_lea.sflag [#allocation4], 1
    %15 = vsyncpa %s14, 0
    loop: start=0, step=1, limit=10
    $region2: #{tpu_custom_call.1} parent=1 // loop_pre_header
      _
    $region3: #{tpu_custom_call.1} parent=1 // loop_header
      %s17 = sphi 0, %s21
      %p18 = scmp.ge.s32.totalorder %s17, 10
      %s24 = sphi 0, %s36
      %s25 = sphi 0, %s32
      %s26 = sphi 0, %s24
      %s27 = sphi 0, %s25
      %s28 = sphi 0, %s26
      %s29 = sphi 0, %s27
      %s39 = sphi 0, %s41
      %s42 = sphi 0, %s39
      %s43 = sphi 0, %s42
      %s59 = sphi 0, %s43
      %s65 = sphi 0, %s67
      %s68 = sphi 0, %s65
      %s69 = sphi 0, %s68
      %s85 = sphi 0, %s69
      %s91 = sphi 0, %s93
      %s94 = sphi 0, %s91
      %s95 = sphi 0, %s94
      %s111 = sphi 0, %s95
      %s117 = sphi 0, %s119
      %s120 = sphi 0, %s117
      %s121 = sphi 0, %s120
      %s137 = sphi 0, %s121
      %s143 = sphi 0, %s145
      %s146 = sphi 0, %s143
      %s147 = sphi 0, %s146
      %s163 = sphi 0, %s147
      %s167 = sphi 0, %s167
      %s169 = sphi 0, %s167
      %s170 = sphi 0, %s169
      %s184 = sphi 0, %s170
      %s188 = sphi 0, %s188
      %s190 = sphi 0, %s188
      %s191 = sphi 0, %s190
      %s205 = sphi 0, %s191
      %s209 = sphi 0, %s209
      %s211 = sphi 0, %s209
      %s212 = sphi 0, %s211
      %s226 = sphi 0, %s212
      %s232 = sphi 0, %s234
      %s235 = sphi 0, %s232
      %s236 = sphi 0, %s235
      %s252 = sphi 0, %s236
    $region4: #{tpu_custom_call.1} parent=1 // loop_header_branch
      %20 = sbr.rel (%p18) target = $region8
    $region5: #{tpu_custom_call.1} parent=1 // loop_body
      %s22 = ssub.s32 %s17, 1
      %s23 = ssub.s32 %s17, 2
      %s30 = sadd.s32 1, %s25
      %p31 = scmp.ge.s32.totalorder %s30, 4
      %s32 = scalar_select %p31, 0, %s30
      %s33 = sadd.s32 1, %s24
      %s34 = scalar_select %p31, %s33, %s24
      %p35 = scmp.ge.s32.totalorder %s34, 2
      %s36 = scalar_select %p35, 0, %s34
      %s37 = ssub.s32 %s24, %s36
      %p38 = scmp.eq.s32.totalorder %s37, 0
      %s40 = sadd.s32 %s39, 1
      %s41 = scalar_select %p38, %s39, %s40
      %p44 = pneg %p38
      %p45 = scmp.eq.s32.totalorder %s17, 7
      %p46 = por %p44, %p45
      %p47 = scmp.ne.s32.totalorder %s39, %s42
      %p48 = scmp.eq.s32.totalorder %s17, 0
      %p49 = por %p47, %p48
      %p50 = scmp.ne.s32.totalorder %s39, %s42
      %p51 = scmp.eq.s32.totalorder %s22, 7
      %p52 = por %p50, %p51
      %p53 = scmp.ne.s32.totalorder %s42, %s43
      %p54 = scmp.eq.s32.totalorder %s22, 0
      %p55 = por %p53, %p54
      %p56 = scmp.ne.s32.totalorder %s42, %s43
      %p57 = scmp.eq.s32.totalorder %s23, 7
      %p58 = por %p56, %p57
      %p60 = scmp.ne.s32.totalorder %s43, %s59
      %p61 = scmp.eq.s32.totalorder %s23, 0
      %p62 = por %p60, %p61
      %s63 = ssub.s32 %s24, %s36
      %p64 = scmp.eq.s32.totalorder %s63, 0
      %s66 = sadd.s32 %s65, 1
      %s67 = scalar_select %p64, %s65, %s66
      %p70 = pneg %p64
      %p71 = scmp.eq.s32.totalorder %s17, 7
      %p72 = por %p70, %p71
      %p73 = scmp.ne.s32.totalorder %s65, %s68
      %p74 = scmp.eq.s32.totalorder %s17, 0
      %p75 = por %p73, %p74
      %p76 = scmp.ne.s32.totalorder %s65, %s68
      %p77 = scmp.eq.s32.totalorder %s22, 7
      %p78 = por %p76, %p77
      %p79 = scmp.ne.s32.totalorder %s68, %s69
      %p80 = scmp.eq.s32.totalorder %s22, 0
      %p81 = por %p79, %p80
      %p82 = scmp.ne.s32.totalorder %s68, %s69
      %p83 = scmp.eq.s32.totalorder %s23, 7
      %p84 = por %p82, %p83
      %p86 = scmp.ne.s32.totalorder %s69, %s85
      %p87 = scmp.eq.s32.totalorder %s23, 0
      %p88 = por %p86, %p87
      %s89 = ssub.s32 %s25, %s32
      %p90 = scmp.eq.s32.totalorder %s89, 0
      %s92 = sadd.s32 %s91, 1
      %s93 = scalar_select %p90, %s91, %s92
      %p96 = pneg %p90
      %p97 = scmp.eq.s32.totalorder %s17, 7
      %p98 = por %p96, %p97
      %p99 = scmp.ne.s32.totalorder %s91, %s94
      %p100 = scmp.eq.s32.totalorder %s17, 0
      %p101 = por %p99, %p100
      %p102 = scmp.ne.s32.totalorder %s91, %s94
      %p103 = scmp.eq.s32.totalorder %s22, 7
      %p104 = por %p102, %p103
      %p105 = scmp.ne.s32.totalorder %s94, %s95
      %p106 = scmp.eq.s32.totalorder %s22, 0
      %p107 = por %p105, %p106
      %p108 = scmp.ne.s32.totalorder %s94, %s95
      %p109 = scmp.eq.s32.totalorder %s23, 7
      %p110 = por %p108, %p109
      %p112 = scmp.ne.s32.totalorder %s95, %s111
      %p113 = scmp.eq.s32.totalorder %s23, 0
      %p114 = por %p112, %p113
      %s115 = ssub.s32 %s25, %s32
      %p116 = scmp.eq.s32.totalorder %s115, 0
      %s118 = sadd.s32 %s117, 1
      %s119 = scalar_select %p116, %s117, %s118
      %p122 = pneg %p116
      %p123 = scmp.eq.s32.totalorder %s17, 7
      %p124 = por %p122, %p123
      %p125 = scmp.ne.s32.totalorder %s117, %s120
      %p126 = scmp.eq.s32.totalorder %s17, 0
      %p127 = por %p125, %p126
      %p128 = scmp.ne.s32.totalorder %s117, %s120
      %p129 = scmp.eq.s32.totalorder %s22, 7
      %p130 = por %p128, %p129
      %p131 = scmp.ne.s32.totalorder %s120, %s121
      %p132 = scmp.eq.s32.totalorder %s22, 0
      %p133 = por %p131, %p132
      %p134 = scmp.ne.s32.totalorder %s120, %s121
      %p135 = scmp.eq.s32.totalorder %s23, 7
      %p136 = por %p134, %p135
      %p138 = scmp.ne.s32.totalorder %s121, %s137
      %p139 = scmp.eq.s32.totalorder %s23, 0
      %p140 = por %p138, %p139
      %s141 = ssub.s32 %s25, %s32
      %p142 = scmp.eq.s32.totalorder %s141, 0
      %s144 = sadd.s32 %s143, 1
      %s145 = scalar_select %p142, %s143, %s144
      %p148 = pneg %p142
      %p149 = scmp.eq.s32.totalorder %s17, 7
      %p150 = por %p148, %p149
      %p151 = scmp.ne.s32.totalorder %s143, %s146
      %p152 = scmp.eq.s32.totalorder %s17, 0
      %p153 = por %p151, %p152
      %p154 = scmp.ne.s32.totalorder %s143, %s146
      %p155 = scmp.eq.s32.totalorder %s22, 7
      %p156 = por %p154, %p155
      %p157 = scmp.ne.s32.totalorder %s146, %s147
      %p158 = scmp.eq.s32.totalorder %s22, 0
      %p159 = por %p157, %p158
      %p160 = scmp.ne.s32.totalorder %s146, %s147
      %p161 = scmp.eq.s32.totalorder %s23, 7
      %p162 = por %p160, %p161
      %p164 = scmp.ne.s32.totalorder %s147, %s163
      %p165 = scmp.eq.s32.totalorder %s23, 0
      %p166 = por %p164, %p165
      %s168 = sadd.s32 %s167, 1
      %p171 = scmp.eq.s32.totalorder %s17, 7
      %p172 = scmp.ne.s32.totalorder %s167, %s169
      %p173 = scmp.eq.s32.totalorder %s17, 0
      %p174 = por %p172, %p173
      %p175 = scmp.ne.s32.totalorder %s167, %s169
      %p176 = scmp.eq.s32.totalorder %s22, 7
      %p177 = por %p175, %p176
      %p178 = scmp.ne.s32.totalorder %s169, %s170
      %p179 = scmp.eq.s32.totalorder %s22, 0
      %p180 = por %p178, %p179
      %p181 = scmp.ne.s32.totalorder %s169, %s170
      %p182 = scmp.eq.s32.totalorder %s23, 7
      %p183 = por %p181, %p182
      %p185 = scmp.ne.s32.totalorder %s170, %s184
      %p186 = scmp.eq.s32.totalorder %s23, 0
      %p187 = por %p185, %p186
      %s189 = sadd.s32 %s188, 1
      %p192 = scmp.eq.s32.totalorder %s17, 7
      %p193 = scmp.ne.s32.totalorder %s188, %s190
      %p194 = scmp.eq.s32.totalorder %s17, 0
      %p195 = por %p193, %p194
      %p196 = scmp.ne.s32.totalorder %s188, %s190
      %p197 = scmp.eq.s32.totalorder %s22, 7
      %p198 = por %p196, %p197
      %p199 = scmp.ne.s32.totalorder %s190, %s191
      %p200 = scmp.eq.s32.totalorder %s22, 0
      %p201 = por %p199, %p200
      %p202 = scmp.ne.s32.totalorder %s190, %s191
      %p203 = scmp.eq.s32.totalorder %s23, 7
      %p204 = por %p202, %p203
      %p206 = scmp.ne.s32.totalorder %s191, %s205
      %p207 = scmp.eq.s32.totalorder %s23, 0
      %p208 = por %p206, %p207
      %s210 = sadd.s32 %s209, 1
      %p213 = scmp.eq.s32.totalorder %s17, 7
      %p214 = scmp.ne.s32.totalorder %s209, %s211
      %p215 = scmp.eq.s32.totalorder %s17, 0
      %p216 = por %p214, %p215
      %p217 = scmp.ne.s32.totalorder %s209, %s211
      %p218 = scmp.eq.s32.totalorder %s22, 7
      %p219 = por %p217, %p218
      %p220 = scmp.ne.s32.totalorder %s211, %s212
      %p221 = scmp.eq.s32.totalorder %s22, 0
      %p222 = por %p220, %p221
      %p223 = scmp.ne.s32.totalorder %s211, %s212
      %p224 = scmp.eq.s32.totalorder %s23, 7
      %p225 = por %p223, %p224
      %p227 = scmp.ne.s32.totalorder %s212, %s226
      %p228 = scmp.eq.s32.totalorder %s23, 0
      %p229 = por %p227, %p228
      %s230 = ssub.s32 %s24, %s36
      %p231 = scmp.eq.s32.totalorder %s230, 0
      %s233 = sadd.s32 %s232, 1
      %s234 = scalar_select %p231, %s232, %s233
      %p237 = pneg %p231
      %p238 = scmp.eq.s32.totalorder %s17, 7
      %p239 = por %p237, %p238
      %p240 = scmp.ne.s32.totalorder %s232, %s235
      %p241 = scmp.eq.s32.totalorder %s17, 0
      %p242 = por %p240, %p241
      %p243 = scmp.ne.s32.totalorder %s232, %s235
      %p244 = scmp.eq.s32.totalorder %s22, 7
      %p245 = por %p243, %p244
      %p246 = scmp.ne.s32.totalorder %s235, %s236
      %p247 = scmp.eq.s32.totalorder %s22, 0
      %p248 = por %p246, %p247
      %p249 = scmp.ne.s32.totalorder %s235, %s236
      %p250 = scmp.eq.s32.totalorder %s23, 7
      %p251 = por %p249, %p250
      %p253 = scmp.ne.s32.totalorder %s236, %s252
      %p254 = scmp.eq.s32.totalorder %s23, 0
      %p255 = por %p253, %p254
      %p256 = scmp.le.s32.totalorder 1, %s17
      %p257 = scmp.lt.s32.totalorder %s17, 9
      %p258 = pnand %p256, %p257
      %p259 = pneg %p258
      // Predicated region
      $region9: #{tpu_custom_call.1} parent=5 // pred_check
        _
      $region10: #{tpu_custom_call.1} parent=5 // pred_check_branch
        %261 = sbr.rel (%p258) target = $region12
      $region11: #{tpu_custom_call.1} parent=5 // pred_region
        %s262 = ssub.s32 %s17, 1
        // Predicated region
        $region13: #{tpu_custom_call.1} parent=11 // pred_check
          %p263 = pneg %p180
        $region14: #{tpu_custom_call.1} parent=11 // pred_check_branch
          %265 = sbr.rel (%p263) target = $region16
        $region15: #{tpu_custom_call.1} parent=11 // pred_region
          _
        $region16: #{tpu_custom_call.1} parent=11 // pred_fallthru
          _
        // Predicated region
        $region17: #{tpu_custom_call.1} parent=11 // pred_check
          %p266 = pneg %p201
        $region18: #{tpu_custom_call.1} parent=11 // pred_check_branch
          %268 = sbr.rel (%p266) target = $region20
        $region19: #{tpu_custom_call.1} parent=11 // pred_region
          _
        $region20: #{tpu_custom_call.1} parent=11 // pred_fallthru
          _
        // Predicated region
        $region21: #{tpu_custom_call.1} parent=11 // pred_check
          %p269 = pneg %p222
        $region22: #{tpu_custom_call.1} parent=11 // pred_check_branch
          %271 = sbr.rel (%p269) target = $region24
        $region23: #{tpu_custom_call.1} parent=11 // pred_region
          _
        $region24: #{tpu_custom_call.1} parent=11 // pred_fallthru
          _
      $region12: #{tpu_custom_call.1} parent=5 // pred_fallthru
        _
      %p272 = scmp.lt.s32.totalorder %s17, 8
      // Predicated region
      $region25: #{tpu_custom_call.1} parent=5 // pred_check
        %p273 = pneg %p272
      $region26: #{tpu_custom_call.1} parent=5 // pred_check_branch
        %275 = sbr.rel (%p273) target = $region28
      $region27: #{tpu_custom_call.1} parent=5 // pred_region
        // Predicated region
        $region29: #{tpu_custom_call.1} parent=27 // pred_check
          %p276 = pneg %p49
        $region30: #{tpu_custom_call.1} parent=27 // pred_check_branch
          %278 = sbr.rel (%p276) target = $region32
        $region31: #{tpu_custom_call.1} parent=27 // pred_region
          %p279 = scmp.lt.s32.totalorder %s24, 1
          %s280 = scalar_select %p279, %s24, 1
          %s281 = smul.addr %s280, 8
          %s282 = scalar_lea.vmem %s0, %s281
        $region32: #{tpu_custom_call.1} parent=27 // pred_fallthru
          _
        // Predicated region
        $region33: #{tpu_custom_call.1} parent=27 // pred_check
          %p283 = pneg %p75
        $region34: #{tpu_custom_call.1} parent=27 // pred_check_branch
          %285 = sbr.rel (%p283) target = $region36
        $region35: #{tpu_custom_call.1} parent=27 // pred_region
          %p286 = scmp.lt.s32.totalorder %s24, 1
          %s287 = scalar_select %p286, %s24, 1
          %s288 = scalar_lea.vmem %s1, %s287
        $region36: #{tpu_custom_call.1} parent=27 // pred_fallthru
          _
        // Predicated region
        $region37: #{tpu_custom_call.1} parent=27 // pred_check
          %p289 = pneg %p101
        $region38: #{tpu_custom_call.1} parent=27 // pred_check_branch
          %291 = sbr.rel (%p289) target = $region40
        $region39: #{tpu_custom_call.1} parent=27 // pred_region
          %p292 = scmp.lt.s32.totalorder %s25, 3
          %s293 = scalar_select %p292, %s25, 3
          %s294 = smul.addr %s293, 4
          %s295 = smul.addr %s294, 8
          %s296 = scalar_lea.vmem %s2, %s295
        $region40: #{tpu_custom_call.1} parent=27 // pred_fallthru
          _
        // Predicated region
        $region41: #{tpu_custom_call.1} parent=27 // pred_check
          %p297 = pneg %p127
        $region42: #{tpu_custom_call.1} parent=27 // pred_check_branch
          %299 = sbr.rel (%p297) target = $region44
        $region43: #{tpu_custom_call.1} parent=27 // pred_region
          %p300 = scmp.lt.s32.totalorder %s25, 3
          %s301 = scalar_select %p300, %s25, 3
          %s302 = scalar_lea.vmem %s3, %s301
        $region44: #{tpu_custom_call.1} parent=27 // pred_fallthru
          _
        // Predicated region
        $region45: #{tpu_custom_call.1} parent=27 // pred_check
          %p303 = pneg %p153
        $region46: #{tpu_custom_call.1} parent=27 // pred_check_branch
          %305 = sbr.rel (%p303) target = $region48
        $region47: #{tpu_custom_call.1} parent=27 // pred_region
          %p306 = scmp.lt.s32.totalorder %s25, 3
          %s307 = scalar_select %p306, %s25, 3
          %s308 = smul.addr %s307, 8
          %s309 = scalar_lea.vmem %s4, %s308
        $region48: #{tpu_custom_call.1} parent=27 // pred_fallthru
          _
      $region28: #{tpu_custom_call.1} parent=5 // pred_fallthru
        _
      %p310 = scmp.le.s32.totalorder 1, %s17
      %p311 = scmp.lt.s32.totalorder %s17, 9
      %p312 = pnand %p310, %p311
      %p313 = pneg %p312
      // Predicated region
      $region49: #{tpu_custom_call.1} parent=5 // pred_check
        _
      $region50: #{tpu_custom_call.1} parent=5 // pred_check_branch
        %315 = sbr.rel (%p312) target = $region52
      $region51: #{tpu_custom_call.1} parent=5 // pred_region
        %s316 = ssub.s32 %s17, 1
        %p317 = scmp.lt.s32.totalorder %s26, 1
        %s318 = scalar_select %p317, %s26, 1
        %s319 = smul.addr %s318, 8
        %s320 = scalar_lea.vmem %s0, %s319
        %p321 = pneg %p55
        %p322 = pneg %p52
        %p323 = scmp.lt.s32.totalorder %s26, 1
        %s324 = scalar_select %p323, %s26, 1
        %s325 = scalar_lea.vmem %s1, %s324
        %p326 = pneg %p81
        %p327 = pneg %p78
        %p328 = scmp.lt.s32.totalorder %s27, 3
        %s329 = scalar_select %p328, %s27, 3
        %s330 = smul.addr %s329, 4
        %s331 = smul.addr %s330, 8
        %s332 = scalar_lea.vmem %s2, %s331
        %p333 = pneg %p107
        %p334 = pneg %p104
        %p335 = scmp.lt.s32.totalorder %s27, 3
        %s336 = scalar_select %p335, %s27, 3
        %s337 = scalar_lea.vmem %s3, %s336
        %p338 = pneg %p133
        %p339 = pneg %p130
        %p340 = scmp.lt.s32.totalorder %s27, 3
        %s341 = scalar_select %p340, %s27, 3
        %s342 = smul.addr %s341, 8
        %s343 = scalar_lea.vmem %s4, %s342
        %p344 = pneg %p159
        %p345 = pneg %p156
        %p346 = pneg %p180
        %p347 = pneg %p177
        %p348 = pneg %p201
        %p349 = pneg %p198
        %p350 = pneg %p222
        %p351 = pneg %p219
        %p352 = pneg %p248
        %p353 = pneg %p245
        %s354 = sand.u32 %s235, 1
        %s355 = scalar_lea.sflag [#allocation4], %s354
        %s356 = sand.u32 %s235, 1
        %s357 = smul.addr %s356, 8
        %s358 = scalar_lea.vmem [#allocation3], %s357
        %p359 = scmp.lt.s32.totalorder %s26, 1
        %s360 = scalar_select %p359, %s26, 1
        %s361 = smul.addr %s360, 8
        %s362 = scalar_lea.vmem %s0, %s361
        %p363 = scmp.lt.s32.totalorder %s26, 1
        %s364 = scalar_select %p363, %s26, 1
        %s365 = scalar_lea.vmem %s1, %s364
        %p366 = scmp.lt.s32.totalorder %s27, 3
        %s367 = scalar_select %p366, %s27, 3
        %s368 = smul.addr %s367, 4
        %s369 = smul.addr %s368, 8
        %s370 = scalar_lea.vmem %s2, %s369
        %p371 = scmp.lt.s32.totalorder %s27, 3
        %s372 = scalar_select %p371, %s27, 3
        %s373 = scalar_lea.vmem %s3, %s372
        %p374 = scmp.lt.s32.totalorder %s27, 3
        %s375 = scalar_select %p374, %s27, 3
        %s376 = smul.addr %s375, 8
        %s377 = scalar_lea.vmem %s4, %s376
        %p378 = scmp.eq.s32.totalorder %s27, 0
        // Predicated region
        $region53: #{tpu_custom_call.1} parent=51 // pred_check
          %p379 = pneg %p378
        $region54: #{tpu_custom_call.1} parent=51 // pred_check_branch
          %381 = sbr.rel (%p379) target = $region56
        $region55: #{tpu_custom_call.1} parent=51 // pred_region
          %vm382 = vcmask 261120
          %383 = vst.msk [vmem:[#allocation2] sm:$0xff] %vm382, 0.0
        $region56: #{tpu_custom_call.1} parent=51 // pred_fallthru
          _
        %v384 = vld [vmem:[%s362] sm:$0xff]
        %v385 = vld [vmem:[%s370] sm:$0xff]
        %v386 = vld [vmem:[%s370 + $0x8] sm:$0xff]
        %v387 = vld [vmem:[%s370 + $0x10] sm:$0xff]
        %v388 = vld [vmem:[%s370 + $0x18] sm:$0xff]
        %v389 = vld [vmem:[%s373] sm:$0x1]
        %v391 = vlaneseq
        %v392 = vshrl.u32 %v391, 7
        %v393 = vsub.s32 0, %v392
        %v394 = vrot.slane %v389, %v393
        %vm396 = vcmask 261120
        %v398 = vsel %vm396, %v384, 0
        %400 = vmatprep.subr.mxu0 0.0
        %401 = vmatpush1.msra.mxu0 0.0
        %402 = vmatprep.subr.mxu0 0.0
        %403 = vmatpush1.msra.mxu0 0.0
        %404 = vmatprep.subr.mxu0 0.0
        %405 = vmatpush1.msra.mxu0 0.0
        %406 = vmatprep.subr.mxu0 0.0
        %407 = vmatpush1.msra.mxu0 0.0
        %408 = vmatprep.subr.mxu0 0.0
        %409 = vmatpush1.msra.mxu0 0.0
        %410 = vmatprep.subr.mxu0 0.0
        %411 = vmatpush1.msra.mxu0 0.0
        %412 = vmatprep.subr.mxu0 0.0
        %413 = vmatpush1.msra.mxu0 0.0
        %414 = vmatprep.subr.mxu0 0.0
        %415 = vmatpush1.msra.mxu0 0.0
        %416 = vmatprep.subr.mxu0 0.0
        %417 = vmatpush1.msra.mxu0 0.0
        %418 = vmatprep.subr.mxu0 0.0
        %419 = vmatpush1.msra.mxu0 0.0
        %420 = vmatprep.subr.mxu0 0.0
        %421 = vmatpush1.msra.mxu0 0.0
        %422 = vmatprep.subr.mxu0 0.0
        %423 = vmatpush1.msra.mxu0 0.0
        %424 = vmatprep.subr.mxu0 0.0
        %425 = vmatpush1.msra.mxu0 %v388
        %426 = vmatprep.subr.mxu0 0.0
        %427 = vmatpush1.msra.mxu0 %v387
        %428 = vmatprep.subr.mxu0 0.0
        %429 = vmatpush1.msra.mxu0 %v386
        %430 = vmatprep.subr.mxu0 0.0
        %431 = vmatpush1.msra.mxu0 %v385
        %432 = vmatprep.subr.mxu0 0.0
        %433 = vmatpush2.msra.mxu0 0.0
        %434 = vmatprep.subr.mxu0 0.0
        %435 = vmatpush2.msra.mxu0 0.0
        %436 = vmatprep.subr.mxu0 0.0
        %437 = vmatpush2.msra.mxu0 0.0
        %438 = vmatprep.subr.mxu0 0.0
        %439 = vmatpush2.msra.mxu0 0.0
        %440 = vmatprep.subr.mxu0 0.0
        %441 = vmatpush2.msra.mxu0 0.0
        %442 = vmatprep.subr.mxu0 0.0
        %443 = vmatpush2.msra.mxu0 0.0
        %444 = vmatprep.subr.mxu0 0.0
        %445 = vmatpush2.msra.mxu0 0.0
        %446 = vmatprep.subr.mxu0 0.0
        %447 = vmatpush2.msra.mxu0 0.0
        %448 = vmatprep.subr.mxu0 0.0
        %449 = vmatpush2.msra.mxu0 0.0
        %450 = vmatprep.subr.mxu0 0.0
        %451 = vmatpush2.msra.mxu0 0.0
        %452 = vmatprep.subr.mxu0 0.0
        %453 = vmatpush2.msra.mxu0 0.0
        %454 = vmatprep.subr.mxu0 0.0
        %455 = vmatpush2.msra.mxu0 0.0
        %456 = vmatprep.subr.mxu0 0.0
        %457 = vmatpush2.msra.mxu0 0.0
        %458 = vmatprep.subr.mxu0 0.0
        %459 = vmatpush2.msra.mxu0 0.0
        %460 = vmatprep.subr.mxu0 0.0
        %461 = vmatpush2.msra.mxu0 0.0
        %462 = vmatprep.subr.mxu0 0.0
        %463 = vmatpush2.msra.mxu0 0.0
        %464 = vmatprep.mubr.f32.mxu0 0.0
        %465 = vmatmul.mubr.f32.gmra.mxu0 %v398
        %v466 = vpop.f32.mrf.mxu0
        %v467 = vadd.f32 %v394, %v466
        %v468 = vpop.f32.mrf.mxu0
        %469 = vdwg.mxu0
        %v470 = vld [vmem:[%s365] sm:$0x1]
        %v472 = vlaneseq
        %v473 = vshrl.u32 %v472, 7
        %v474 = vsub.s32 0, %v473
        %v475 = vrot.slane %v470, %v474
        %478 = vrot.lane.b32.xlu0 %v467, 120
        %v479 = vpop.permute.xlu0 %478
        %vm480 = vcmask 64512
        %v481 = vsel %vm480, %v467, 0
        %v483 = vsel %vm480, %v479, 0
        %485 = vmatprep.subr.mxu0 0.0
        %486 = vmatpush1.xpose.msra.mxu0 0.0
        %487 = vmatprep.subr.mxu0 0.0
        %488 = vmatpush1.xpose.msra.mxu0 0.0
        %489 = vmatprep.subr.mxu0 0.0
        %490 = vmatpush1.xpose.msra.mxu0 0.0
        %491 = vmatprep.subr.mxu0 0.0
        %492 = vmatpush1.xpose.msra.mxu0 0.0
        %493 = vmatprep.subr.mxu0 0.0
        %494 = vmatpush1.xpose.msra.mxu0 0.0
        %495 = vmatprep.subr.mxu0 0.0
        %496 = vmatpush1.xpose.msra.mxu0 0.0
        %497 = vmatprep.subr.mxu0 0.0
        %498 = vmatpush1.xpose.msra.mxu0 0.0
        %499 = vmatprep.subr.mxu0 0.0
        %500 = vmatpush1.xpose.msra.mxu0 0.0
        %501 = vmatprep.subr.mxu0 0.0
        %502 = vmatpush1.xpose.msra.mxu0 0.0
        %503 = vmatprep.subr.mxu0 0.0
        %504 = vmatpush1.xpose.msra.mxu0 0.0
        %505 = vmatprep.subr.mxu0 0.0
        %506 = vmatpush1.xpose.msra.mxu0 0.0
        %507 = vmatprep.subr.mxu0 0.0
        %508 = vmatpush1.xpose.msra.mxu0 0.0
        %509 = vmatprep.subr.mxu0 0.0
        %510 = vmatpush1.xpose.msra.mxu0 0.0
        %511 = vmatprep.subr.mxu0 0.0
        %512 = vmatpush1.xpose.msra.mxu0 0.0
        %513 = vmatprep.subr.mxu0 0.0
        %514 = vmatpush1.xpose.msra.mxu0 0.0
        %515 = vmatprep.subr.mxu0 0.0
        %516 = vmatpush1.xpose.msra.mxu0 %v483
        %517 = vmatprep.subr.mxu0 0.0
        %518 = vmatpush2.xpose.msra.mxu0 0.0
        %519 = vmatprep.subr.mxu0 0.0
        %520 = vmatpush2.xpose.msra.mxu0 0.0
        %521 = vmatprep.subr.mxu0 0.0
        %522 = vmatpush2.xpose.msra.mxu0 0.0
        %523 = vmatprep.subr.mxu0 0.0
        %524 = vmatpush2.xpose.msra.mxu0 0.0
        %525 = vmatprep.subr.mxu0 0.0
        %526 = vmatpush2.xpose.msra.mxu0 0.0
        %527 = vmatprep.subr.mxu0 0.0
        %528 = vmatpush2.xpose.msra.mxu0 0.0
        %529 = vmatprep.subr.mxu0 0.0
        %530 = vmatpush2.xpose.msra.mxu0 0.0
        %531 = vmatprep.subr.mxu0 0.0
        %532 = vmatpush2.xpose.msra.mxu0 0.0
        %533 = vmatprep.subr.mxu0 0.0
        %534 = vmatpush2.xpose.msra.mxu0 0.0
        %535 = vmatprep.subr.mxu0 0.0
        %536 = vmatpush2.xpose.msra.mxu0 0.0
        %537 = vmatprep.subr.mxu0 0.0
        %538 = vmatpush2.xpose.msra.mxu0 0.0
        %539 = vmatprep.subr.mxu0 0.0
        %540 = vmatpush2.xpose.msra.mxu0 0.0
        %541 = vmatprep.subr.mxu0 0.0
        %542 = vmatpush2.xpose.msra.mxu0 0.0
        %543 = vmatprep.subr.mxu0 0.0
        %544 = vmatpush2.xpose.msra.mxu0 0.0
        %545 = vmatprep.subr.mxu0 0.0
        %546 = vmatpush2.xpose.msra.mxu0 0.0
        %547 = vmatprep.subr.mxu0 0.0
        %548 = vmatpush2.xpose.msra.mxu0 0.0
        %549 = vmatprep.mubr.f32.mxu0 0.0
        %550 = vmatmul.mubr.f32.gmra.mxu0 %v481
        %v551 = vpop.f32.mrf.mxu0
        %v552 = vadd.f32 %v475, %v551
        %v553 = vpop.f32.mrf.mxu0
        %554 = vdwg.mxu0
        %v555 = vsel %vm480, %v552, -inf
        %556 = vmax.xlane.f32.xlu0 %v555
        %v557 = vpop.xlane.xlu0 %556
        %v558 = vsub.f32 %v552, %v557
        %v559 = vmul.f32 %v558, 1.442695
        %v560 = vpow.pop %v559
        %v561 = vsel %vm480, %v560, 0.0
        %562 = vadd.xlane.f32.xlu0 %v561
        %v563 = vpop.xlane.xlu0 %562
        %564 = vrot.lane.b32.xlu0 %v467, 112
        %v565 = vpop.permute.xlu0 %564
        %v568 = vsel %vm480, %v560, 0
        %570 = vmatprep.subr.mxu0 0.0
        %571 = vmatpush1.msra.mxu0 0.0
        %572 = vmatprep.subr.mxu0 0.0
        %573 = vmatpush1.msra.mxu0 0.0
        %574 = vmatprep.subr.mxu0 0.0
        %575 = vmatpush1.msra.mxu0 0.0
        %576 = vmatprep.subr.mxu0 0.0
        %577 = vmatpush1.msra.mxu0 0.0
        %578 = vmatprep.subr.mxu0 0.0
        %579 = vmatpush1.msra.mxu0 0.0
        %580 = vmatprep.subr.mxu0 0.0
        %581 = vmatpush1.msra.mxu0 0.0
        %582 = vmatprep.subr.mxu0 0.0
        %583 = vmatpush1.msra.mxu0 0.0
        %584 = vmatprep.subr.mxu0 0.0
        %585 = vmatpush1.msra.mxu0 0.0
        %586 = vmatprep.subr.mxu0 0.0
        %587 = vmatpush1.msra.mxu0 0.0
        %588 = vmatprep.subr.mxu0 0.0
        %589 = vmatpush1.msra.mxu0 0.0
        %590 = vmatprep.subr.mxu0 0.0
        %591 = vmatpush1.msra.mxu0 0.0
        %592 = vmatprep.subr.mxu0 0.0
        %593 = vmatpush1.msra.mxu0 0.0
        %594 = vmatprep.subr.mxu0 0.0
        %595 = vmatpush1.msra.mxu0 0.0
        %596 = vmatprep.subr.mxu0 0.0
        %597 = vmatpush1.msra.mxu0 0.0
        %598 = vmatprep.subr.mxu0 0.0
        %599 = vmatpush1.msra.mxu0 0.0
        %600 = vmatprep.subr.mxu0 0.0
        %601 = vmatpush1.msra.mxu0 %v565
        %602 = vmatprep.subr.mxu0 0.0
        %603 = vmatpush2.msra.mxu0 0.0
        %604 = vmatprep.subr.mxu0 0.0
        %605 = vmatpush2.msra.mxu0 0.0
        %606 = vmatprep.subr.mxu0 0.0
        %607 = vmatpush2.msra.mxu0 0.0
        %608 = vmatprep.subr.mxu0 0.0
        %609 = vmatpush2.msra.mxu0 0.0
        %610 = vmatprep.subr.mxu0 0.0
        %611 = vmatpush2.msra.mxu0 0.0
        %612 = vmatprep.subr.mxu0 0.0
        %613 = vmatpush2.msra.mxu0 0.0
        %614 = vmatprep.subr.mxu0 0.0
        %615 = vmatpush2.msra.mxu0 0.0
        %616 = vmatprep.subr.mxu0 0.0
        %617 = vmatpush2.msra.mxu0 0.0
        %618 = vmatprep.subr.mxu0 0.0
        %619 = vmatpush2.msra.mxu0 0.0
        %620 = vmatprep.subr.mxu0 0.0
        %621 = vmatpush2.msra.mxu0 0.0
        %622 = vmatprep.subr.mxu0 0.0
        %623 = vmatpush2.msra.mxu0 0.0
        %624 = vmatprep.subr.mxu0 0.0
        %625 = vmatpush2.msra.mxu0 0.0
        %626 = vmatprep.subr.mxu0 0.0
        %627 = vmatpush2.msra.mxu0 0.0
        %628 = vmatprep.subr.mxu0 0.0
        %629 = vmatpush2.msra.mxu0 0.0
        %630 = vmatprep.subr.mxu0 0.0
        %631 = vmatpush2.msra.mxu0 0.0
        %632 = vmatprep.subr.mxu0 0.0
        %633 = vmatpush2.msra.mxu0 0.0
        %634 = vmatprep.mubr.f32.mxu0 0.0
        %635 = vmatmul.mubr.f32.gmra.mxu0 %v568
        %v636 = vpop.f32.mrf.mxu0
        %v637 = vadd.f32 0.0, %v636
        %v638 = vpop.f32.mrf.mxu0
        %639 = vdwg.mxu0
        %v640 = vrcp.pop %v563
        %v641 = vmul.f32 %v563, %v640
        %v642 = vsub.f32 2.0, %v641
        %v643 = vmul.f32 %v640, %v642
        %v644 = vmul.f32 %v637, %v643
        %v645 = vld [vmem:[#allocation2] sm:$0xff]
        %v646 = vld [vmem:[%s377] sm:$0xff]
        %v648 = vsel %vm480, %v644, 0
        %650 = vmatprep.subr.mxu0 0.0
        %651 = vmatpush1.msra.mxu0 0.0
        %652 = vmatprep.subr.mxu0 0.0
        %653 = vmatpush1.msra.mxu0 0.0
        %654 = vmatprep.subr.mxu0 0.0
        %655 = vmatpush1.msra.mxu0 0.0
        %656 = vmatprep.subr.mxu0 0.0
        %657 = vmatpush1.msra.mxu0 0.0
        %658 = vmatprep.subr.mxu0 0.0
        %659 = vmatpush1.msra.mxu0 0.0
        %660 = vmatprep.subr.mxu0 0.0
        %661 = vmatpush1.msra.mxu0 0.0
        %662 = vmatprep.subr.mxu0 0.0
        %663 = vmatpush1.msra.mxu0 0.0
        %664 = vmatprep.subr.mxu0 0.0
        %665 = vmatpush1.msra.mxu0 0.0
        %666 = vmatprep.subr.mxu0 0.0
        %667 = vmatpush1.msra.mxu0 0.0
        %668 = vmatprep.subr.mxu0 0.0
        %669 = vmatpush1.msra.mxu0 0.0
        %670 = vmatprep.subr.mxu0 0.0
        %671 = vmatpush1.msra.mxu0 0.0
        %672 = vmatprep.subr.mxu0 0.0
        %673 = vmatpush1.msra.mxu0 0.0
        %674 = vmatprep.subr.mxu0 0.0
        %675 = vmatpush1.msra.mxu0 0.0
        %676 = vmatprep.subr.mxu0 0.0
        %677 = vmatpush1.msra.mxu0 0.0
        %678 = vmatprep.subr.mxu0 0.0
        %679 = vmatpush1.msra.mxu0 0.0
        %680 = vmatprep.subr.mxu0 0.0
        %681 = vmatpush1.msra.mxu0 %v646
        %682 = vmatprep.subr.mxu0 0.0
        %683 = vmatpush2.msra.mxu0 0.0
        %684 = vmatprep.subr.mxu0 0.0
        %685 = vmatpush2.msra.mxu0 0.0
        %686 = vmatprep.subr.mxu0 0.0
        %687 = vmatpush2.msra.mxu0 0.0
        %688 = vmatprep.subr.mxu0 0.0
        %689 = vmatpush2.msra.mxu0 0.0
        %690 = vmatprep.subr.mxu0 0.0
        %691 = vmatpush2.msra.mxu0 0.0
        %692 = vmatprep.subr.mxu0 0.0
        %693 = vmatpush2.msra.mxu0 0.0
        %694 = vmatprep.subr.mxu0 0.0
        %695 = vmatpush2.msra.mxu0 0.0
        %696 = vmatprep.subr.mxu0 0.0
        %697 = vmatpush2.msra.mxu0 0.0
        %698 = vmatprep.subr.mxu0 0.0
        %699 = vmatpush2.msra.mxu0 0.0
        %700 = vmatprep.subr.mxu0 0.0
        %701 = vmatpush2.msra.mxu0 0.0
        %702 = vmatprep.subr.mxu0 0.0
        %703 = vmatpush2.msra.mxu0 0.0
        %704 = vmatprep.subr.mxu0 0.0
        %705 = vmatpush2.msra.mxu0 0.0
        %706 = vmatprep.subr.mxu0 0.0
        %707 = vmatpush2.msra.mxu0 0.0
        %708 = vmatprep.subr.mxu0 0.0
        %709 = vmatpush2.msra.mxu0 0.0
        %710 = vmatprep.subr.mxu0 0.0
        %711 = vmatpush2.msra.mxu0 0.0
        %712 = vmatprep.subr.mxu0 0.0
        %713 = vmatpush2.msra.mxu0 0.0
        %714 = vmatprep.mubr.f32.mxu0 0.0
        %715 = vmatmul.mubr.f32.gmra.mxu0 %v648
        %v716 = vpop.f32.mrf.mxu0
        %v717 = vadd.f32 0.0, %v716
        %v718 = vpop.f32.mrf.mxu0
        %719 = vdwg.mxu0
        %v720 = vadd.f32 %v645, %v717
        %721 = vst.msk [vmem:[#allocation2] sm:$0xff] %vm396, %v720
        %p722 = scmp.eq.s32.totalorder %s27, 3
        // Predicated region
        $region57: #{tpu_custom_call.1} parent=51 // pred_check
          %p723 = pneg %p722
        $region58: #{tpu_custom_call.1} parent=51 // pred_check_branch
          %725 = sbr.rel (%p723) target = $region60
        $region59: #{tpu_custom_call.1} parent=51 // pred_region
          %v726 = vld [vmem:[#allocation2] sm:$0xff]
          %v727 = vld [vmem:[%s5] sm:$0x1]
          %v729 = vlaneseq
          %v730 = vshrl.u32 %v729, 7
          %v731 = vsub.s32 0, %v730
          %v732 = vrot.slane %v727, %v731
          %v734 = vadd.f32 %v726, %v732
          %v735 = vadd.f32 %v734, %v384
          %v736 = vsel %vm396, %v735, 0.0
          %737 = vadd.xlane.f32.xlu0 %v736
          %v738 = vpop.xlane.xlu0 %737
          %v739 = vrcp.pop 32.0
          %v740 = vmul.f32 %v738, %v739
          %v741 = vsub.f32 %v735, %v740
          %v742 = vmul.f32 %v741, %v741
          %v743 = vsel %vm396, %v742, 0.0
          %744 = vadd.xlane.f32.xlu0 %v743
          %v745 = vpop.xlane.xlu0 %744
          %v746 = vmul.f32 %v745, %v739
          %v747 = vadd.f32 %v746, 1e-12
          %v748 = vrsqrt.pop %v747
          %v749 = vmul.f32 %v741, %v748
          %v750 = vld [vmem:[%s6] sm:$0x1]
          %v752 = vlaneseq
          %v753 = vshrl.u32 %v752, 7
          %v754 = vsub.s32 0, %v753
          %v755 = vrot.slane %v750, %v754
          %v757 = vmul.f32 %v749, %v755
          %v758 = vld [vmem:[%s7] sm:$0x1]
          %v760 = vlaneseq
          %v761 = vshrl.u32 %v760, 7
          %v762 = vsub.s32 0, %v761
          %v763 = vrot.slane %v758, %v762
          %v765 = vadd.f32 %v757, %v763
          %766 = vst.msk [vmem:[%s358] sm:$0xff] %vm396, %v765
        $region60: #{tpu_custom_call.1} parent=51 // pred_fallthru
          _
        %s767 = sand.u32 %s235, 1
        %s768 = scalar_lea.sflag [#allocation4], %s767
        %s769 = sand.u32 %s235, 1
        %s770 = smul.addr %s769, 8
        %s771 = scalar_lea.vmem [#allocation3], %s770
        // Predicated region
        $region61: #{tpu_custom_call.1} parent=51 // pred_check
          %p772 = pneg %p245
        $region62: #{tpu_custom_call.1} parent=51 // pred_check_branch
          %774 = sbr.rel (%p772) target = $region64
        $region63: #{tpu_custom_call.1} parent=51 // pred_region
          %s776 = ssub.s32 128, 128
          %777 = vsyncadd %s768, %s776
          %s778 = smul.addr %s26, 128
          %s779 = scalar_lea.hbm %s8, %s778
          %s781 = sshll.u32 %s771, 4
          %s782 = int_to_ptr.vmem [resolvable:$true] %s781
          %784 = dma.vmem_to_hbm [thread:$0]  %s782, 128, %s779, %s768
        $region64: #{tpu_custom_call.1} parent=51 // pred_fallthru
          _
      $region52: #{tpu_custom_call.1} parent=5 // pred_fallthru
        _
      %p785 = scmp.le.s32.totalorder 2, %s17
      // Predicated region
      $region65: #{tpu_custom_call.1} parent=5 // pred_check
        %p786 = pneg %p785
      $region66: #{tpu_custom_call.1} parent=5 // pred_check_branch
        %788 = sbr.rel (%p786) target = $region68
      $region67: #{tpu_custom_call.1} parent=5 // pred_region
        %s789 = ssub.s32 %s17, 2
        // Predicated region
        $region69: #{tpu_custom_call.1} parent=67 // pred_check
          %p790 = pneg %p251
        $region70: #{tpu_custom_call.1} parent=67 // pred_check_branch
          %792 = sbr.rel (%p790) target = $region72
        $region71: #{tpu_custom_call.1} parent=67 // pred_region
          %s793 = sand.u32 %s236, 1
          %s794 = scalar_lea.sflag [#allocation4], %s793
          %s795 = sand.u32 %s236, 1
          %s796 = smul.addr %s795, 8
          %s797 = scalar_lea.vmem [#allocation3], %s796
          %798 = dma.done %s794, 128
        $region72: #{tpu_custom_call.1} parent=67 // pred_fallthru
          _
      $region68: #{tpu_custom_call.1} parent=5 // pred_fallthru
        _
    $region6: #{tpu_custom_call.1} parent=1 // loop_footer
      %s21 = sadd.s32 1, %s17
    $region7: #{tpu_custom_call.1} parent=1 // loop_footer_branch
      %16 = sbr.rel target = $region3
    $region8: #{tpu_custom_call.1} parent=1 // loop_exit
      _
    %799 = vsyncpa [#allocation4], 1
    %s800 = scalar_lea.sflag [#allocation4], 1
    %801 = vsyncpa %s800, 1

// kernel: tpu_custom_call.1
$region0: #{tpu_custom_call.1}
  #allocation0 [shape = 'u32[]', space=smem, size = 0x4, offset = 0x4, fixed_abs, tag = 'smem constant byte address 0x4 - core index']
  #allocation1 [shape = 'u32[144,128]{1,0:T(1,128)}', space=vmem, size = 0x12000, scoped, tag = 'internal scratch']
  #allocation2 [shape = 'f32[8,32]{1,0:T(8,128)}', space=vmem, size = 0x1000, scoped, tag = 'scratch operand']
  %s0 = inlined_call_operand.vmem [shape: f32[2,8,32], index: 0, kind: input, shape index: {}]
  %s1 = inlined_call_operand.vmem [shape: f32[2,1,8], index: 1, kind: input, shape index: {}]
  %s2 = inlined_call_operand.vmem [shape: f32[4,32,24], index: 2, kind: input, shape index: {}]
  %s3 = inlined_call_operand.vmem [shape: f32[4,1,24], index: 3, kind: input, shape index: {}]
  %s4 = inlined_call_operand.vmem [shape: f32[4,8,32], index: 4, kind: input, shape index: {}]
  %s5 = inlined_call_operand.vmem [shape: f32[1,32], index: 5, kind: input, shape index: {}]
  %s6 = inlined_call_operand.vmem [shape: f32[1,32], index: 6, kind: input, shape index: {}]
  %s7 = inlined_call_operand.vmem [shape: f32[1,32], index: 7, kind: input, shape index: {}]
  %s8 = inlined_call_operand.hbm [shape: f32[2,8,32], index: 8, kind: output, shape index: {}]
  %s9 = sld [smem:[#allocation0]]
  $region73: #{tpu_custom_call.1} parent=0
    _
  %s11 = ssub.s32 1, %s9
  %s12 = scalar_select 0, %s11, %s9
  $region1: #{tpu_custom_call.1} parent=0
    #allocation3 [shape = 'u8[8192]{0}', space=vmem, size = 0x2000, scoped, tag = 'output window, operand 0']
    #allocation4 [shape = 's32[2]{0}', space=sflag, size = 0x8, scoped, tag = 'scoped memory for tpu_custom_call.1']
    %13 = vsyncpa [#allocation4], 0
    %s14 = scalar_lea.sflag [#allocation4], 1
    %15 = vsyncpa %s14, 0
    loop: start=0, step=1, limit=10
    $region2: #{tpu_custom_call.1} parent=1 // loop_pre_header
      _
    $region3: #{tpu_custom_call.1} parent=1 // loop_header
      %s17 = sphi 0, %s21
      %p18 = scmp.ge.s32.totalorder %s17, 10
      %s24 = sphi 0, %s36
      %s25 = sphi 0, %s32
      %s26 = sphi 0, %s24
      %s27 = sphi 0, %s25
      %s28 = sphi 0, %s26
      %s29 = sphi 0, %s27
      %s39 = sphi 0, %s41
      %s42 = sphi 0, %s39
      %s43 = sphi 0, %s42
      %s59 = sphi 0, %s43
      %s65 = sphi 0, %s67
      %s68 = sphi 0, %s65
      %s69 = sphi 0, %s68
      %s85 = sphi 0, %s69
      %s91 = sphi 0, %s93
      %s94 = sphi 0, %s91
      %s95 = sphi 0, %s94
      %s111 = sphi 0, %s95
      %s117 = sphi 0, %s119
      %s120 = sphi 0, %s117
      %s121 = sphi 0, %s120
      %s137 = sphi 0, %s121
      %s143 = sphi 0, %s145
      %s146 = sphi 0, %s143
      %s147 = sphi 0, %s146
      %s163 = sphi 0, %s147
      %s167 = sphi 0, %s167
      %s169 = sphi 0, %s167
      %s170 = sphi 0, %s169
      %s184 = sphi 0, %s170
      %s188 = sphi 0, %s188
      %s190 = sphi 0, %s188
      %s191 = sphi 0, %s190
      %s205 = sphi 0, %s191
      %s209 = sphi 0, %s209
      %s211 = sphi 0, %s209
      %s212 = sphi 0, %s211
      %s226 = sphi 0, %s212
      %s232 = sphi 0, %s234
      %s235 = sphi 0, %s232
      %s236 = sphi 0, %s235
      %s252 = sphi 0, %s236
    $region4: #{tpu_custom_call.1} parent=1 // loop_header_branch
      %20 = sbr.rel (%p18) target = $region8
    $region5: #{tpu_custom_call.1} parent=1 // loop_body
      %s22 = ssub.s32 %s17, 1
      %s23 = ssub.s32 %s17, 2
      %s30 = sadd.s32 1, %s25
      %p31 = scmp.ge.s32.totalorder %s30, 4
      %s32 = scalar_select %p31, 0, %s30
      %s33 = sadd.s32 1, %s24
      %s34 = scalar_select %p31, %s33, %s24
      %p35 = scmp.ge.s32.totalorder %s34, 2
      %s36 = scalar_select %p35, 0, %s34
      %s37 = ssub.s32 %s24, %s36
      %p38 = scmp.eq.s32.totalorder %s37, 0
      %s40 = sadd.s32 %s39, 1
      %s41 = scalar_select %p38, %s39, %s40
      %p44 = pneg %p38
      %p45 = scmp.eq.s32.totalorder %s17, 7
      %p46 = por %p44, %p45
      %p47 = scmp.ne.s32.totalorder %s39, %s42
      %p48 = scmp.eq.s32.totalorder %s17, 0
      %p49 = por %p47, %p48
      %p50 = scmp.ne.s32.totalorder %s39, %s42
      %p51 = scmp.eq.s32.totalorder %s22, 7
      %p52 = por %p50, %p51
      %p53 = scmp.ne.s32.totalorder %s42, %s43
      %p54 = scmp.eq.s32.totalorder %s22, 0
      %p55 = por %p53, %p54
      %p56 = scmp.ne.s32.totalorder %s42, %s43
      %p57 = scmp.eq.s32.totalorder %s23, 7
      %p58 = por %p56, %p57
      %p60 = scmp.ne.s32.totalorder %s43, %s59
      %p61 = scmp.eq.s32.totalorder %s23, 0
      %p62 = por %p60, %p61
      %s63 = ssub.s32 %s24, %s36
      %p64 = scmp.eq.s32.totalorder %s63, 0
      %s66 = sadd.s32 %s65, 1
      %s67 = scalar_select %p64, %s65, %s66
      %p70 = pneg %p64
      %p71 = scmp.eq.s32.totalorder %s17, 7
      %p72 = por %p70, %p71
      %p73 = scmp.ne.s32.totalorder %s65, %s68
      %p74 = scmp.eq.s32.totalorder %s17, 0
      %p75 = por %p73, %p74
      %p76 = scmp.ne.s32.totalorder %s65, %s68
      %p77 = scmp.eq.s32.totalorder %s22, 7
      %p78 = por %p76, %p77
      %p79 = scmp.ne.s32.totalorder %s68, %s69
      %p80 = scmp.eq.s32.totalorder %s22, 0
      %p81 = por %p79, %p80
      %p82 = scmp.ne.s32.totalorder %s68, %s69
      %p83 = scmp.eq.s32.totalorder %s23, 7
      %p84 = por %p82, %p83
      %p86 = scmp.ne.s32.totalorder %s69, %s85
      %p87 = scmp.eq.s32.totalorder %s23, 0
      %p88 = por %p86, %p87
      %s89 = ssub.s32 %s25, %s32
      %p90 = scmp.eq.s32.totalorder %s89, 0
      %s92 = sadd.s32 %s91, 1
      %s93 = scalar_select %p90, %s91, %s92
      %p96 = pneg %p90
      %p97 = scmp.eq.s32.totalorder %s17, 7
      %p98 = por %p96, %p97
      %p99 = scmp.ne.s32.totalorder %s91, %s94
      %p100 = scmp.eq.s32.totalorder %s17, 0
      %p101 = por %p99, %p100
      %p102 = scmp.ne.s32.totalorder %s91, %s94
      %p103 = scmp.eq.s32.totalorder %s22, 7
      %p104 = por %p102, %p103
      %p105 = scmp.ne.s32.totalorder %s94, %s95
      %p106 = scmp.eq.s32.totalorder %s22, 0
      %p107 = por %p105, %p106
      %p108 = scmp.ne.s32.totalorder %s94, %s95
      %p109 = scmp.eq.s32.totalorder %s23, 7
      %p110 = por %p108, %p109
      %p112 = scmp.ne.s32.totalorder %s95, %s111
      %p113 = scmp.eq.s32.totalorder %s23, 0
      %p114 = por %p112, %p113
      %s115 = ssub.s32 %s25, %s32
      %p116 = scmp.eq.s32.totalorder %s115, 0
      %s118 = sadd.s32 %s117, 1
      %s119 = scalar_select %p116, %s117, %s118
      %p122 = pneg %p116
      %p123 = scmp.eq.s32.totalorder %s17, 7
      %p124 = por %p122, %p123
      %p125 = scmp.ne.s32.totalorder %s117, %s120
      %p126 = scmp.eq.s32.totalorder %s17, 0
      %p127 = por %p125, %p126
      %p128 = scmp.ne.s32.totalorder %s117, %s120
      %p129 = scmp.eq.s32.totalorder %s22, 7
      %p130 = por %p128, %p129
      %p131 = scmp.ne.s32.totalorder %s120, %s121
      %p132 = scmp.eq.s32.totalorder %s22, 0
      %p133 = por %p131, %p132
      %p134 = scmp.ne.s32.totalorder %s120, %s121
      %p135 = scmp.eq.s32.totalorder %s23, 7
      %p136 = por %p134, %p135
      %p138 = scmp.ne.s32.totalorder %s121, %s137
      %p139 = scmp.eq.s32.totalorder %s23, 0
      %p140 = por %p138, %p139
      %s141 = ssub.s32 %s25, %s32
      %p142 = scmp.eq.s32.totalorder %s141, 0
      %s144 = sadd.s32 %s143, 1
      %s145 = scalar_select %p142, %s143, %s144
      %p148 = pneg %p142
      %p149 = scmp.eq.s32.totalorder %s17, 7
      %p150 = por %p148, %p149
      %p151 = scmp.ne.s32.totalorder %s143, %s146
      %p152 = scmp.eq.s32.totalorder %s17, 0
      %p153 = por %p151, %p152
      %p154 = scmp.ne.s32.totalorder %s143, %s146
      %p155 = scmp.eq.s32.totalorder %s22, 7
      %p156 = por %p154, %p155
      %p157 = scmp.ne.s32.totalorder %s146, %s147
      %p158 = scmp.eq.s32.totalorder %s22, 0
      %p159 = por %p157, %p158
      %p160 = scmp.ne.s32.totalorder %s146, %s147
      %p161 = scmp.eq.s32.totalorder %s23, 7
      %p162 = por %p160, %p161
      %p164 = scmp.ne.s32.totalorder %s147, %s163
      %p165 = scmp.eq.s32.totalorder %s23, 0
      %p166 = por %p164, %p165
      %s168 = sadd.s32 %s167, 1
      %p171 = scmp.eq.s32.totalorder %s17, 7
      %p172 = scmp.ne.s32.totalorder %s167, %s169
      %p173 = scmp.eq.s32.totalorder %s17, 0
      %p174 = por %p172, %p173
      %p175 = scmp.ne.s32.totalorder %s167, %s169
      %p176 = scmp.eq.s32.totalorder %s22, 7
      %p177 = por %p175, %p176
      %p178 = scmp.ne.s32.totalorder %s169, %s170
      %p179 = scmp.eq.s32.totalorder %s22, 0
      %p180 = por %p178, %p179
      %p181 = scmp.ne.s32.totalorder %s169, %s170
      %p182 = scmp.eq.s32.totalorder %s23, 7
      %p183 = por %p181, %p182
      %p185 = scmp.ne.s32.totalorder %s170, %s184
      %p186 = scmp.eq.s32.totalorder %s23, 0
      %p187 = por %p185, %p186
      %s189 = sadd.s32 %s188, 1
      %p192 = scmp.eq.s32.totalorder %s17, 7
      %p193 = scmp.ne.s32.totalorder %s188, %s190
      %p194 = scmp.eq.s32.totalorder %s17, 0
      %p195 = por %p193, %p194
      %p196 = scmp.ne.s32.totalorder %s188, %s190
      %p197 = scmp.eq.s32.totalorder %s22, 7
      %p198 = por %p196, %p197
      %p199 = scmp.ne.s32.totalorder %s190, %s191
      %p200 = scmp.eq.s32.totalorder %s22, 0
      %p201 = por %p199, %p200
      %p202 = scmp.ne.s32.totalorder %s190, %s191
      %p203 = scmp.eq.s32.totalorder %s23, 7
      %p204 = por %p202, %p203
      %p206 = scmp.ne.s32.totalorder %s191, %s205
      %p207 = scmp.eq.s32.totalorder %s23, 0
      %p208 = por %p206, %p207
      %s210 = sadd.s32 %s209, 1
      %p213 = scmp.eq.s32.totalorder %s17, 7
      %p214 = scmp.ne.s32.totalorder %s209, %s211
      %p215 = scmp.eq.s32.totalorder %s17, 0
      %p216 = por %p214, %p215
      %p217 = scmp.ne.s32.totalorder %s209, %s211
      %p218 = scmp.eq.s32.totalorder %s22, 7
      %p219 = por %p217, %p218
      %p220 = scmp.ne.s32.totalorder %s211, %s212
      %p221 = scmp.eq.s32.totalorder %s22, 0
      %p222 = por %p220, %p221
      %p223 = scmp.ne.s32.totalorder %s211, %s212
      %p224 = scmp.eq.s32.totalorder %s23, 7
      %p225 = por %p223, %p224
      %p227 = scmp.ne.s32.totalorder %s212, %s226
      %p228 = scmp.eq.s32.totalorder %s23, 0
      %p229 = por %p227, %p228
      %s230 = ssub.s32 %s24, %s36
      %p231 = scmp.eq.s32.totalorder %s230, 0
      %s233 = sadd.s32 %s232, 1
      %s234 = scalar_select %p231, %s232, %s233
      %p237 = pneg %p231
      %p238 = scmp.eq.s32.totalorder %s17, 7
      %p239 = por %p237, %p238
      %p240 = scmp.ne.s32.totalorder %s232, %s235
      %p241 = scmp.eq.s32.totalorder %s17, 0
      %p242 = por %p240, %p241
      %p243 = scmp.ne.s32.totalorder %s232, %s235
      %p244 = scmp.eq.s32.totalorder %s22, 7
      %p245 = por %p243, %p244
      %p246 = scmp.ne.s32.totalorder %s235, %s236
      %p247 = scmp.eq.s32.totalorder %s22, 0
      %p248 = por %p246, %p247
      %p249 = scmp.ne.s32.totalorder %s235, %s236
      %p250 = scmp.eq.s32.totalorder %s23, 7
      %p251 = por %p249, %p250
      %p253 = scmp.ne.s32.totalorder %s236, %s252
      %p254 = scmp.eq.s32.totalorder %s23, 0
      %p255 = por %p253, %p254
      %p256 = scmp.le.s32.totalorder 1, %s17
      %p257 = scmp.lt.s32.totalorder %s17, 9
      %p258 = pnand %p256, %p257
      %p259 = pneg %p258
      // Predicated region
      $region9: #{tpu_custom_call.1} parent=5 // pred_check
        _
      $region10: #{tpu_custom_call.1} parent=5 // pred_check_branch
        %261 = sbr.rel (%p258) target = $region12
      $region11: #{tpu_custom_call.1} parent=5 // pred_region
        %s262 = ssub.s32 %s17, 1
        // Predicated region
        $region13: #{tpu_custom_call.1} parent=11 // pred_check
          %p263 = pneg %p180
        $region14: #{tpu_custom_call.1} parent=11 // pred_check_branch
          %265 = sbr.rel (%p263) target = $region16
        $region15: #{tpu_custom_call.1} parent=11 // pred_region
          _
        $region16: #{tpu_custom_call.1} parent=11 // pred_fallthru
          _
        // Predicated region
        $region17: #{tpu_custom_call.1} parent=11 // pred_check
          %p266 = pneg %p201
        $region18: #{tpu_custom_call.1} parent=11 // pred_check_branch
          %268 = sbr.rel (%p266) target = $region20
        $region19: #{tpu_custom_call.1} parent=11 // pred_region
          _
        $region20: #{tpu_custom_call.1} parent=11 // pred_fallthru
          _
        // Predicated region
        $region21: #{tpu_custom_call.1} parent=11 // pred_check
          %p269 = pneg %p222
        $region22: #{tpu_custom_call.1} parent=11 // pred_check_branch
          %271 = sbr.rel (%p269) target = $region24
        $region23: #{tpu_custom_call.1} parent=11 // pred_region
          _
        $region24: #{tpu_custom_call.1} parent=11 // pred_fallthru
          _
      $region12: #{tpu_custom_call.1} parent=5 // pred_fallthru
        _
      %p272 = scmp.lt.s32.totalorder %s17, 8
      // Predicated region
      $region25: #{tpu_custom_call.1} parent=5 // pred_check
        %p273 = pneg %p272
      $region26: #{tpu_custom_call.1} parent=5 // pred_check_branch
        %275 = sbr.rel (%p273) target = $region28
      $region27: #{tpu_custom_call.1} parent=5 // pred_region
        // Predicated region
        $region29: #{tpu_custom_call.1} parent=27 // pred_check
          %p276 = pneg %p49
        $region30: #{tpu_custom_call.1} parent=27 // pred_check_branch
          %278 = sbr.rel (%p276) target = $region32
        $region31: #{tpu_custom_call.1} parent=27 // pred_region
          %p279 = scmp.lt.s32.totalorder %s24, 1
          %s280 = scalar_select %p279, %s24, 1
          %s281 = smul.addr %s280, 8
          %s282 = scalar_lea.vmem %s0, %s281
        $region32: #{tpu_custom_call.1} parent=27 // pred_fallthru
          _
        // Predicated region
        $region33: #{tpu_custom_call.1} parent=27 // pred_check
          %p283 = pneg %p75
        $region34: #{tpu_custom_call.1} parent=27 // pred_check_branch
          %285 = sbr.rel (%p283) target = $region36
        $region35: #{tpu_custom_call.1} parent=27 // pred_region
          %p286 = scmp.lt.s32.totalorder %s24, 1
          %s287 = scalar_select %p286, %s24, 1
          %s288 = scalar_lea.vmem %s1, %s287
        $region36: #{tpu_custom_call.1} parent=27 // pred_fallthru
          _
        // Predicated region
        $region37: #{tpu_custom_call.1} parent=27 // pred_check
          %p289 = pneg %p101
        $region38: #{tpu_custom_call.1} parent=27 // pred_check_branch
          %291 = sbr.rel (%p289) target = $region40
        $region39: #{tpu_custom_call.1} parent=27 // pred_region
          %p292 = scmp.lt.s32.totalorder %s25, 3
          %s293 = scalar_select %p292, %s25, 3
          %s294 = smul.addr %s293, 4
          %s295 = smul.addr %s294, 8
          %s296 = scalar_lea.vmem %s2, %s295
        $region40: #{tpu_custom_call.1} parent=27 // pred_fallthru
          _
        // Predicated region
        $region41: #{tpu_custom_call.1} parent=27 // pred_check
          %p297 = pneg %p127
        $region42: #{tpu_custom_call.1} parent=27 // pred_check_branch
          %299 = sbr.rel (%p297) target = $region44
        $region43: #{tpu_custom_call.1} parent=27 // pred_region
          %p300 = scmp.lt.s32.totalorder %s25, 3
          %s301 = scalar_select %p300, %s25, 3
          %s302 = scalar_lea.vmem %s3, %s301
        $region44: #{tpu_custom_call.1} parent=27 // pred_fallthru
          _
        // Predicated region
        $region45: #{tpu_custom_call.1} parent=27 // pred_check
          %p303 = pneg %p153
        $region46: #{tpu_custom_call.1} parent=27 // pred_check_branch
          %305 = sbr.rel (%p303) target = $region48
        $region47: #{tpu_custom_call.1} parent=27 // pred_region
          %p306 = scmp.lt.s32.totalorder %s25, 3
          %s307 = scalar_select %p306, %s25, 3
          %s308 = smul.addr %s307, 8
          %s309 = scalar_lea.vmem %s4, %s308
        $region48: #{tpu_custom_call.1} parent=27 // pred_fallthru
          _
      $region28: #{tpu_custom_call.1} parent=5 // pred_fallthru
        _
      %p310 = scmp.le.s32.totalorder 1, %s17
      %p311 = scmp.lt.s32.totalorder %s17, 9
      %p312 = pnand %p310, %p311
      %p313 = pneg %p312
      // Predicated region
      $region49: #{tpu_custom_call.1} parent=5 // pred_check
        _
      $region50: #{tpu_custom_call.1} parent=5 // pred_check_branch
        %315 = sbr.rel (%p312) target = $region52
      $region51: #{tpu_custom_call.1} parent=5 // pred_region
        %s316 = ssub.s32 %s17, 1
        %p317 = scmp.lt.s32.totalorder %s26, 1
        %s318 = scalar_select %p317, %s26, 1
        %s319 = smul.addr %s318, 8
        %s320 = scalar_lea.vmem %s0, %s319
        %p321 = pneg %p55
        %p322 = pneg %p52
        %p323 = scmp.lt.s32.totalorder %s26, 1
        %s324 = scalar_select %p323, %s26, 1
        %s325 = scalar_lea.vmem %s1, %s324
        %p326 = pneg %p81
        %p327 = pneg %p78
        %p328 = scmp.lt.s32.totalorder %s27, 3
        %s329 = scalar_select %p328, %s27, 3
        %s330 = smul.addr %s329, 4
        %s331 = smul.addr %s330, 8
        %s332 = scalar_lea.vmem %s2, %s331
        %p333 = pneg %p107
        %p334 = pneg %p104
        %p335 = scmp.lt.s32.totalorder %s27, 3
        %s336 = scalar_select %p335, %s27, 3
        %s337 = scalar_lea.vmem %s3, %s336
        %p338 = pneg %p133
        %p339 = pneg %p130
        %p340 = scmp.lt.s32.totalorder %s27, 3
        %s341 = scalar_select %p340, %s27, 3
        %s342 = smul.addr %s341, 8
        %s343 = scalar_lea.vmem %s4, %s342
        %p344 = pneg %p159
        %p345 = pneg %p156
        %p346 = pneg %p180
        %p347 = pneg %p177
        %p348 = pneg %p201
        %p349 = pneg %p198
        %p350 = pneg %p222
        %p351 = pneg %p219
        %p352 = pneg %p248
        %p353 = pneg %p245
        %s354 = sand.u32 %s235, 1
        %s355 = scalar_lea.sflag [#allocation4], %s354
        %s356 = sand.u32 %s235, 1
        %s357 = smul.addr %s356, 8
        %s358 = scalar_lea.vmem [#allocation3], %s357
        %p359 = scmp.lt.s32.totalorder %s26, 1
        %s360 = scalar_select %p359, %s26, 1
        %s361 = smul.addr %s360, 8
        %s362 = scalar_lea.vmem %s0, %s361
        %p363 = scmp.lt.s32.totalorder %s26, 1
        %s364 = scalar_select %p363, %s26, 1
        %s365 = scalar_lea.vmem %s1, %s364
        %p366 = scmp.lt.s32.totalorder %s27, 3
        %s367 = scalar_select %p366, %s27, 3
        %s368 = smul.addr %s367, 4
        %s369 = smul.addr %s368, 8
        %s370 = scalar_lea.vmem %s2, %s369
        %p371 = scmp.lt.s32.totalorder %s27, 3
        %s372 = scalar_select %p371, %s27, 3
        %s373 = scalar_lea.vmem %s3, %s372
        %p374 = scmp.lt.s32.totalorder %s27, 3
        %s375 = scalar_select %p374, %s27, 3
        %s376 = smul.addr %s375, 8
        %s377 = scalar_lea.vmem %s4, %s376
        %p378 = scmp.eq.s32.totalorder %s27, 0
        // Predicated region
        $region53: #{tpu_custom_call.1} parent=51 // pred_check
          %p379 = pneg %p378
        $region54: #{tpu_custom_call.1} parent=51 // pred_check_branch
          %381 = sbr.rel (%p379) target = $region56
        $region55: #{tpu_custom_call.1} parent=51 // pred_region
          %vm382 = vcmask 261120
          %383 = vst.msk [vmem:[#allocation2] sm:$0xff] %vm382, 0.0
        $region56: #{tpu_custom_call.1} parent=51 // pred_fallthru
          _
        %v384 = vld [vmem:[%s362] sm:$0xff]
        %v385 = vld [vmem:[%s370] sm:$0xff]
        %v386 = vld [vmem:[%s370 + $0x8] sm:$0xff]
        %v387 = vld [vmem:[%s370 + $0x10] sm:$0xff]
        %v388 = vld [vmem:[%s370 + $0x18] sm:$0xff]
        %v389 = vld [vmem:[%s373] sm:$0x1]
        %v391 = vlaneseq
        %v392 = vshrl.u32 %v391, 7
        %v393 = vsub.s32 0, %v392
        %v394 = vrot.slane %v389, %v393
        %vm396 = vcmask 261120
        %v398 = vsel %vm396, %v384, 0
        %400 = vmatprep.subr.mxu0 0.0
        %401 = vmatpush1.msra.mxu0 0.0
        %402 = vmatprep.subr.mxu0 0.0
        %403 = vmatpush1.msra.mxu0 0.0
        %404 = vmatprep.subr.mxu0 0.0
        %405 = vmatpush1.msra.mxu0 0.0
        %406 = vmatprep.subr.mxu0 0.0
        %407 = vmatpush1.msra.mxu0 0.0
        %408 = vmatprep.subr.mxu0 0.0
        %409 = vmatpush1.msra.mxu0 0.0
        %410 = vmatprep.subr.mxu0 0.0
        %411 = vmatpush1.msra.mxu0 0.0
        %412 = vmatprep.subr.mxu0 0.0
        %413 = vmatpush1.msra.mxu0 0.0
        %414 = vmatprep.subr.mxu0 0.0
        %415 = vmatpush1.msra.mxu0 0.0
        %416 = vmatprep.subr.mxu0 0.0
        %417 = vmatpush1.msra.mxu0 0.0
        %418 = vmatprep.subr.mxu0 0.0
        %419 = vmatpush1.msra.mxu0 0.0
        %420 = vmatprep.subr.mxu0 0.0
        %421 = vmatpush1.msra.mxu0 0.0
        %422 = vmatprep.subr.mxu0 0.0
        %423 = vmatpush1.msra.mxu0 0.0
        %424 = vmatprep.subr.mxu0 0.0
        %425 = vmatpush1.msra.mxu0 %v388
        %426 = vmatprep.subr.mxu0 0.0
        %427 = vmatpush1.msra.mxu0 %v387
        %428 = vmatprep.subr.mxu0 0.0
        %429 = vmatpush1.msra.mxu0 %v386
        %430 = vmatprep.subr.mxu0 0.0
        %431 = vmatpush1.msra.mxu0 %v385
        %432 = vmatprep.subr.mxu0 0.0
        %433 = vmatpush2.msra.mxu0 0.0
        %434 = vmatprep.subr.mxu0 0.0
        %435 = vmatpush2.msra.mxu0 0.0
        %436 = vmatprep.subr.mxu0 0.0
        %437 = vmatpush2.msra.mxu0 0.0
        %438 = vmatprep.subr.mxu0 0.0
        %439 = vmatpush2.msra.mxu0 0.0
        %440 = vmatprep.subr.mxu0 0.0
        %441 = vmatpush2.msra.mxu0 0.0
        %442 = vmatprep.subr.mxu0 0.0
        %443 = vmatpush2.msra.mxu0 0.0
        %444 = vmatprep.subr.mxu0 0.0
        %445 = vmatpush2.msra.mxu0 0.0
        %446 = vmatprep.subr.mxu0 0.0
        %447 = vmatpush2.msra.mxu0 0.0
        %448 = vmatprep.subr.mxu0 0.0
        %449 = vmatpush2.msra.mxu0 0.0
        %450 = vmatprep.subr.mxu0 0.0
        %451 = vmatpush2.msra.mxu0 0.0
        %452 = vmatprep.subr.mxu0 0.0
        %453 = vmatpush2.msra.mxu0 0.0
        %454 = vmatprep.subr.mxu0 0.0
        %455 = vmatpush2.msra.mxu0 0.0
        %456 = vmatprep.subr.mxu0 0.0
        %457 = vmatpush2.msra.mxu0 0.0
        %458 = vmatprep.subr.mxu0 0.0
        %459 = vmatpush2.msra.mxu0 0.0
        %460 = vmatprep.subr.mxu0 0.0
        %461 = vmatpush2.msra.mxu0 0.0
        %462 = vmatprep.subr.mxu0 0.0
        %463 = vmatpush2.msra.mxu0 0.0
        %464 = vmatprep.mubr.f32.mxu0 0.0
        %465 = vmatmul.mubr.f32.gmra.mxu0 %v398
        %v466 = vpop.f32.mrf.mxu0
        %v467 = vadd.f32 %v394, %v466
        %v468 = vpop.f32.mrf.mxu0
        %469 = vdwg.mxu0
        %v470 = vld [vmem:[%s365] sm:$0x1]
        %v472 = vlaneseq
        %v473 = vshrl.u32 %v472, 7
        %v474 = vsub.s32 0, %v473
        %v475 = vrot.slane %v470, %v474
        %478 = vrot.lane.b32.xlu0 %v467, 120
        %v479 = vpop.permute.xlu0 %478
        %vm480 = vcmask 64512
        %v481 = vsel %vm480, %v467, 0
        %v483 = vsel %vm480, %v479, 0
        %485 = vmatprep.subr.mxu0 0.0
        %486 = vmatpush1.xpose.msra.mxu0 0.0
        %487 = vmatprep.subr.mxu0 0.0
        %488 = vmatpush1.xpose.msra.mxu0 0.0
        %489 = vmatprep.subr.mxu0 0.0
        %490 = vmatpush1.xpose.msra.mxu0 0.0
        %491 = vmatprep.subr.mxu0 0.0
        %492 = vmatpush1.xpose.msra.mxu0 0.0
        %493 = vmatprep.subr.mxu0 0.0
        %494 = vmatpush1.xpose.msra.mxu0 0.0
        %495 = vmatprep.subr.mxu0 0.0
        %496 = vmatpush1.xpose.msra.mxu0 0.0
        %497 = vmatprep.subr.mxu0 0.0
        %498 = vmatpush1.xpose.msra.mxu0 0.0
        %499 = vmatprep.subr.mxu0 0.0
        %500 = vmatpush1.xpose.msra.mxu0 0.0
        %501 = vmatprep.subr.mxu0 0.0
        %502 = vmatpush1.xpose.msra.mxu0 0.0
        %503 = vmatprep.subr.mxu0 0.0
        %504 = vmatpush1.xpose.msra.mxu0 0.0
        %505 = vmatprep.subr.mxu0 0.0
        %506 = vmatpush1.xpose.msra.mxu0 0.0
        %507 = vmatprep.subr.mxu0 0.0
        %508 = vmatpush1.xpose.msra.mxu0 0.0
        %509 = vmatprep.subr.mxu0 0.0
        %510 = vmatpush1.xpose.msra.mxu0 0.0
        %511 = vmatprep.subr.mxu0 0.0
        %512 = vmatpush1.xpose.msra.mxu0 0.0
        %513 = vmatprep.subr.mxu0 0.0
        %514 = vmatpush1.xpose.msra.mxu0 0.0
        %515 = vmatprep.subr.mxu0 0.0
        %516 = vmatpush1.xpose.msra.mxu0 %v483
        %517 = vmatprep.subr.mxu0 0.0
        %518 = vmatpush2.xpose.msra.mxu0 0.0
        %519 = vmatprep.subr.mxu0 0.0
        %520 = vmatpush2.xpose.msra.mxu0 0.0
        %521 = vmatprep.subr.mxu0 0.0
        %522 = vmatpush2.xpose.msra.mxu0 0.0
        %523 = vmatprep.subr.mxu0 0.0
        %524 = vmatpush2.xpose.msra.mxu0 0.0
        %525 = vmatprep.subr.mxu0 0.0
        %526 = vmatpush2.xpose.msra.mxu0 0.0
        %527 = vmatprep.subr.mxu0 0.0
        %528 = vmatpush2.xpose.msra.mxu0 0.0
        %529 = vmatprep.subr.mxu0 0.0
        %530 = vmatpush2.xpose.msra.mxu0 0.0
        %531 = vmatprep.subr.mxu0 0.0
        %532 = vmatpush2.xpose.msra.mxu0 0.0
        %533 = vmatprep.subr.mxu0 0.0
        %534 = vmatpush2.xpose.msra.mxu0 0.0
        %535 = vmatprep.subr.mxu0 0.0
        %536 = vmatpush2.xpose.msra.mxu0 0.0
        %537 = vmatprep.subr.mxu0 0.0
        %538 = vmatpush2.xpose.msra.mxu0 0.0
        %539 = vmatprep.subr.mxu0 0.0
        %540 = vmatpush2.xpose.msra.mxu0 0.0
        %541 = vmatprep.subr.mxu0 0.0
        %542 = vmatpush2.xpose.msra.mxu0 0.0
        %543 = vmatprep.subr.mxu0 0.0
        %544 = vmatpush2.xpose.msra.mxu0 0.0
        %545 = vmatprep.subr.mxu0 0.0
        %546 = vmatpush2.xpose.msra.mxu0 0.0
        %547 = vmatprep.subr.mxu0 0.0
        %548 = vmatpush2.xpose.msra.mxu0 0.0
        %549 = vmatprep.mubr.f32.mxu0 0.0
        %550 = vmatmul.mubr.f32.gmra.mxu0 %v481
        %v551 = vpop.f32.mrf.mxu0
        %v552 = vadd.f32 %v475, %v551
        %v553 = vpop.f32.mrf.mxu0
        %554 = vdwg.mxu0
        %v555 = vsel %vm480, %v552, -inf
        %556 = vmax.xlane.f32.xlu0 %v555
        %v557 = vpop.xlane.xlu0 %556
        %v558 = vsub.f32 %v552, %v557
        %v559 = vmul.f32 %v558, 1.442695
        %v560 = vpow.pop %v559
        %v561 = vsel %vm480, %v560, 0.0
        %562 = vadd.xlane.f32.xlu0 %v561
        %v563 = vpop.xlane.xlu0 %562
        %564 = vrot.lane.b32.xlu0 %v467, 112
        %v565 = vpop.permute.xlu0 %564
        %v568 = vsel %vm480, %v560, 0
        %570 = vmatprep.subr.mxu0 0.0
        %571 = vmatpush1.msra.mxu0 0.0
        %572 = vmatprep.subr.mxu0 0.0
        %573 = vmatpush1.msra.mxu0 0.0
        %574 = vmatprep.subr.mxu0 0.0
        %575 = vmatpush1.msra.mxu0 0.0
        %576 = vmatprep.subr.mxu0 0.0
        %577 = vmatpush1.msra.mxu0 0.0
        %578 = vmatprep.subr.mxu0 0.0
        %579 = vmatpush1.msra.mxu0 0.0
        %580 = vmatprep.subr.mxu0 0.0
        %581 = vmatpush1.msra.mxu0 0.0
        %582 = vmatprep.subr.mxu0 0.0
        %583 = vmatpush1.msra.mxu0 0.0
        %584 = vmatprep.subr.mxu0 0.0
        %585 = vmatpush1.msra.mxu0 0.0
        %586 = vmatprep.subr.mxu0 0.0
        %587 = vmatpush1.msra.mxu0 0.0
        %588 = vmatprep.subr.mxu0 0.0
        %589 = vmatpush1.msra.mxu0 0.0
        %590 = vmatprep.subr.mxu0 0.0
        %591 = vmatpush1.msra.mxu0 0.0
        %592 = vmatprep.subr.mxu0 0.0
        %593 = vmatpush1.msra.mxu0 0.0
        %594 = vmatprep.subr.mxu0 0.0
        %595 = vmatpush1.msra.mxu0 0.0
        %596 = vmatprep.subr.mxu0 0.0
        %597 = vmatpush1.msra.mxu0 0.0
        %598 = vmatprep.subr.mxu0 0.0
        %599 = vmatpush1.msra.mxu0 0.0
        %600 = vmatprep.subr.mxu0 0.0
        %601 = vmatpush1.msra.mxu0 %v565
        %602 = vmatprep.subr.mxu0 0.0
        %603 = vmatpush2.msra.mxu0 0.0
        %604 = vmatprep.subr.mxu0 0.0
        %605 = vmatpush2.msra.mxu0 0.0
        %606 = vmatprep.subr.mxu0 0.0
        %607 = vmatpush2.msra.mxu0 0.0
        %608 = vmatprep.subr.mxu0 0.0
        %609 = vmatpush2.msra.mxu0 0.0
        %610 = vmatprep.subr.mxu0 0.0
        %611 = vmatpush2.msra.mxu0 0.0
        %612 = vmatprep.subr.mxu0 0.0
        %613 = vmatpush2.msra.mxu0 0.0
        %614 = vmatprep.subr.mxu0 0.0
        %615 = vmatpush2.msra.mxu0 0.0
        %616 = vmatprep.subr.mxu0 0.0
        %617 = vmatpush2.msra.mxu0 0.0
        %618 = vmatprep.subr.mxu0 0.0
        %619 = vmatpush2.msra.mxu0 0.0
        %620 = vmatprep.subr.mxu0 0.0
        %621 = vmatpush2.msra.mxu0 0.0
        %622 = vmatprep.subr.mxu0 0.0
        %623 = vmatpush2.msra.mxu0 0.0
        %624 = vmatprep.subr.mxu0 0.0
        %625 = vmatpush2.msra.mxu0 0.0
        %626 = vmatprep.subr.mxu0 0.0
        %627 = vmatpush2.msra.mxu0 0.0
        %628 = vmatprep.subr.mxu0 0.0
        %629 = vmatpush2.msra.mxu0 0.0
        %630 = vmatprep.subr.mxu0 0.0
        %631 = vmatpush2.msra.mxu0 0.0
        %632 = vmatprep.subr.mxu0 0.0
        %633 = vmatpush2.msra.mxu0 0.0
        %634 = vmatprep.mubr.f32.mxu0 0.0
        %635 = vmatmul.mubr.f32.gmra.mxu0 %v568
        %v636 = vpop.f32.mrf.mxu0
        %v637 = vadd.f32 0.0, %v636
        %v638 = vpop.f32.mrf.mxu0
        %639 = vdwg.mxu0
        %v640 = vrcp.pop %v563
        %v641 = vmul.f32 %v563, %v640
        %v642 = vsub.f32 2.0, %v641
        %v643 = vmul.f32 %v640, %v642
        %v644 = vmul.f32 %v637, %v643
        %v645 = vld [vmem:[#allocation2] sm:$0xff]
        %v646 = vld [vmem:[%s377] sm:$0xff]
        %v648 = vsel %vm480, %v644, 0
        %650 = vmatprep.subr.mxu0 0.0
        %651 = vmatpush1.msra.mxu0 0.0
        %652 = vmatprep.subr.mxu0 0.0
        %653 = vmatpush1.msra.mxu0 0.0
        %654 = vmatprep.subr.mxu0 0.0
        %655 = vmatpush1.msra.mxu0 0.0
        %656 = vmatprep.subr.mxu0 0.0
        %657 = vmatpush1.msra.mxu0 0.0
        %658 = vmatprep.subr.mxu0 0.0
        %659 = vmatpush1.msra.mxu0 0.0
        %660 = vmatprep.subr.mxu0 0.0
        %661 = vmatpush1.msra.mxu0 0.0
        %662 = vmatprep.subr.mxu0 0.0
        %663 = vmatpush1.msra.mxu0 0.0
        %664 = vmatprep.subr.mxu0 0.0
        %665 = vmatpush1.msra.mxu0 0.0
        %666 = vmatprep.subr.mxu0 0.0
        %667 = vmatpush1.msra.mxu0 0.0
        %668 = vmatprep.subr.mxu0 0.0
        %669 = vmatpush1.msra.mxu0 0.0
        %670 = vmatprep.subr.mxu0 0.0
        %671 = vmatpush1.msra.mxu0 0.0
        %672 = vmatprep.subr.mxu0 0.0
        %673 = vmatpush1.msra.mxu0 0.0
        %674 = vmatprep.subr.mxu0 0.0
        %675 = vmatpush1.msra.mxu0 0.0
        %676 = vmatprep.subr.mxu0 0.0
        %677 = vmatpush1.msra.mxu0 0.0
        %678 = vmatprep.subr.mxu0 0.0
        %679 = vmatpush1.msra.mxu0 0.0
        %680 = vmatprep.subr.mxu0 0.0
        %681 = vmatpush1.msra.mxu0 %v646
        %682 = vmatprep.subr.mxu0 0.0
        %683 = vmatpush2.msra.mxu0 0.0
        %684 = vmatprep.subr.mxu0 0.0
        %685 = vmatpush2.msra.mxu0 0.0
        %686 = vmatprep.subr.mxu0 0.0
        %687 = vmatpush2.msra.mxu0 0.0
        %688 = vmatprep.subr.mxu0 0.0
        %689 = vmatpush2.msra.mxu0 0.0
        %690 = vmatprep.subr.mxu0 0.0
        %691 = vmatpush2.msra.mxu0 0.0
        %692 = vmatprep.subr.mxu0 0.0
        %693 = vmatpush2.msra.mxu0 0.0
        %694 = vmatprep.subr.mxu0 0.0
        %695 = vmatpush2.msra.mxu0 0.0
        %696 = vmatprep.subr.mxu0 0.0
        %697 = vmatpush2.msra.mxu0 0.0
        %698 = vmatprep.subr.mxu0 0.0
        %699 = vmatpush2.msra.mxu0 0.0
        %700 = vmatprep.subr.mxu0 0.0
        %701 = vmatpush2.msra.mxu0 0.0
        %702 = vmatprep.subr.mxu0 0.0
        %703 = vmatpush2.msra.mxu0 0.0
        %704 = vmatprep.subr.mxu0 0.0
        %705 = vmatpush2.msra.mxu0 0.0
        %706 = vmatprep.subr.mxu0 0.0
        %707 = vmatpush2.msra.mxu0 0.0
        %708 = vmatprep.subr.mxu0 0.0
        %709 = vmatpush2.msra.mxu0 0.0
        %710 = vmatprep.subr.mxu0 0.0
        %711 = vmatpush2.msra.mxu0 0.0
        %712 = vmatprep.subr.mxu0 0.0
        %713 = vmatpush2.msra.mxu0 0.0
        %714 = vmatprep.mubr.f32.mxu0 0.0
        %715 = vmatmul.mubr.f32.gmra.mxu0 %v648
        %v716 = vpop.f32.mrf.mxu0
        %v717 = vadd.f32 0.0, %v716
        %v718 = vpop.f32.mrf.mxu0
        %719 = vdwg.mxu0
        %v720 = vadd.f32 %v645, %v717
        %721 = vst.msk [vmem:[#allocation2] sm:$0xff] %vm396, %v720
        %p722 = scmp.eq.s32.totalorder %s27, 3
        // Predicated region
        $region57: #{tpu_custom_call.1} parent=51 // pred_check
          %p723 = pneg %p722
        $region58: #{tpu_custom_call.1} parent=51 // pred_check_branch
          %725 = sbr.rel (%p723) target = $region60
        $region59: #{tpu_custom_call.1} parent=51 // pred_region
          %v726 = vld [vmem:[#allocation2] sm:$0xff]
          %v727 = vld [vmem:[%s5] sm:$0x1]
          %v729 = vlaneseq
          %v730 = vshrl.u32 %v729, 7
          %v731 = vsub.s32 0, %v730
          %v732 = vrot.slane %v727, %v731
          %v734 = vadd.f32 %v726, %v732
          %v735 = vadd.f32 %v734, %v384
          %v736 = vsel %vm396, %v735, 0.0
          %737 = vadd.xlane.f32.xlu0 %v736
          %v738 = vpop.xlane.xlu0 %737
          %v739 = vrcp.pop 32.0
          %v740 = vmul.f32 %v738, %v739
          %v741 = vsub.f32 %v735, %v740
          %v742 = vmul.f32 %v741, %v741
          %v743 = vsel %vm396, %v742, 0.0
          %744 = vadd.xlane.f32.xlu0 %v743
          %v745 = vpop.xlane.xlu0 %744
          %v746 = vmul.f32 %v745, %v739
          %v747 = vadd.f32 %v746, 1e-12
          %v748 = vrsqrt.pop %v747
          %v749 = vmul.f32 %v741, %v748
          %v750 = vld [vmem:[%s6] sm:$0x1]
          %v752 = vlaneseq
          %v753 = vshrl.u32 %v752, 7
          %v754 = vsub.s32 0, %v753
          %v755 = vrot.slane %v750, %v754
          %v757 = vmul.f32 %v749, %v755
          %v758 = vld [vmem:[%s7] sm:$0x1]
          %v760 = vlaneseq
          %v761 = vshrl.u32 %v760, 7
          %v762 = vsub.s32 0, %v761
          %v763 = vrot.slane %v758, %v762
          %v765 = vadd.f32 %v757, %v763
          %766 = vst.msk [vmem:[%s358] sm:$0xff] %vm396, %v765
        $region60: #{tpu_custom_call.1} parent=51 // pred_fallthru
          _
        %s767 = sand.u32 %s235, 1
        %s768 = scalar_lea.sflag [#allocation4], %s767
        %s769 = sand.u32 %s235, 1
        %s770 = smul.addr %s769, 8
        %s771 = scalar_lea.vmem [#allocation3], %s770
        // Predicated region
        $region61: #{tpu_custom_call.1} parent=51 // pred_check
          %p772 = pneg %p245
        $region62: #{tpu_custom_call.1} parent=51 // pred_check_branch
          %774 = sbr.rel (%p772) target = $region64
        $region63: #{tpu_custom_call.1} parent=51 // pred_region
          %s776 = ssub.s32 128, 128
          %777 = vsyncadd %s768, %s776
          %s778 = smul.addr %s26, 128
          %s779 = scalar_lea.hbm %s8, %s778
          %s781 = sshll.u32 %s771, 4
          %s782 = int_to_ptr.vmem [resolvable:$true] %s781
          %784 = dma.vmem_to_hbm [thread:$0]  %s782, 128, %s779, %s768
        $region64: #{tpu_custom_call.1} parent=51 // pred_fallthru
          _
      $region52: #{tpu_custom_call.1} parent=5 // pred_fallthru
        _
      %p785 = scmp.le.s32.totalorder 2, %s17
      // Predicated region
      $region65: #{tpu_custom_call.1} parent=5 // pred_check
        %p786 = pneg %p785
      $region66: #{tpu_custom_call.1} parent=5 // pred_check_branch
        %788 = sbr.rel (%p786) target = $region68
      $region67: #{tpu_custom_call.1} parent=5 // pred_region
        %s789 = ssub.s32 %s17, 2
        // Predicated region
        $region69: #{tpu_custom_call.1} parent=67 // pred_check
          %p790 = pneg %p251
        $region70: #{tpu_custom_call.1} parent=67 // pred_check_branch
          %792 = sbr.rel (%p790) target = $region72
        $region71: #{tpu_custom_call.1} parent=67 // pred_region
          %s793 = sand.u32 %s236, 1
          %s794 = scalar_lea.sflag [#allocation4], %s793
          %s795 = sand.u32 %s236, 1
          %s796 = smul.addr %s795, 8
          %s797 = scalar_lea.vmem [#allocation3], %s796
          %798 = dma.done %s794, 128
        $region72: #{tpu_custom_call.1} parent=67 // pred_fallthru
          _
      $region68: #{tpu_custom_call.1} parent=5 // pred_fallthru
        _
    $region6: #{tpu_custom_call.1} parent=1 // loop_footer
      %s21 = sadd.s32 1, %s17
    $region7: #{tpu_custom_call.1} parent=1 // loop_footer_branch
      %16 = sbr.rel target = $region3
    $region8: #{tpu_custom_call.1} parent=1 // loop_exit
      _
    %799 = vsyncpa [#allocation4], 1
    %s800 = scalar_lea.sflag [#allocation4], 1
    %801 = vsyncpa %s800, 1

</llo_original>
